<compile_context>
chip_gen: v6e
topology: v6e:2x2x1
jax: 0.10.0
libtpu: 0.0.40
codegen_flags: <defaults>
</compile_context>

<pallas_src>
import jax
import jax.numpy as jnp
import numpy as np
from jax import lax
from jax.experimental import pallas as pl
from jax.experimental.pallas import tpu as pltpu


# ---------------------------------------------------------------------------
# Kernel
# ---------------------------------------------------------------------------
def make_parnet_kernel(H, W):
    HW = H * W

    def parnet_kernel(x_ref, wcat_ref, b_ref, wsse_ref, bsse_ref, o_ref):
        # x_ref   : (1, HW, Cp) f32   flattened NHWC image (channels lane-padded)
        # wcat_ref: (3, 3*Cp, Cp) bf16 folded conv3x3(+conv1x1)+BN weights;
        #                              wcat[ky] = [W(ky,0); W(ky,1); W(ky,2)]
        #                              stacked along the input-channel axis
        # b_ref   : (1, Cp) f32        fused conv bias (b1 + b3 after BN folding)
        # wsse_ref: (Cp, Cp) bf16      sse 1x1 conv weight (in, out)
        # bsse_ref: (1, Cp) f32        sse 1x1 conv bias
        # o_ref   : (1, HW, Cp) f32
        Cp = o_ref.shape[-1]
        bf16 = jnp.bfloat16

        xc = x_ref[0]                                       # (HW, Cp) f32

        # Column (+/-1 along W) shifted copies via sublane rolls on the
        # flattened image (XLU slot) instead of offset slices (which would
        # force relayout copies).  The column that would wrap across a row
        # boundary is zeroed *before* the roll.
        pos = lax.broadcasted_iota(jnp.int32, (HW, Cp), 0)
        w_idx = lax.rem(pos, W)
        not_last = (w_idx < (W - 1)).astype(xc.dtype)       # kills w == W-1
        not_first = (w_idx > 0).astype(xc.dtype)            # kills w == 0

        xl = pltpu.roll(xc * not_last, 1, axis=0)           # -> x[h, w-1]
        xr = pltpu.roll(xc * not_first, HW - 1, axis=0)     # -> x[h, w+1]

        # Lane-axis concat: one bf16 operand holding the three kx taps' inputs.
        xcat = jnp.concatenate(
            [xl.astype(bf16), xc.astype(bf16), xr.astype(bf16)], axis=-1)

        # One matmul per kernel row ky (each already sums the 3 kx taps and,
        # for ky=1, the folded conv1x1).  f32 accumulation on the MXU.
        conv = jnp.dot(xcat, wcat_ref[1], preferred_element_type=jnp.float32)

        zrow = jnp.zeros((W, Cp), jnp.float32)
        o_km1 = jnp.dot(xcat, wcat_ref[0], preferred_element_type=jnp.float32)
        conv = conv + jnp.concatenate([zrow, o_km1[:HW - W]], axis=0)  # row h-1
        o_kp1 = jnp.dot(xcat, wcat_ref[2], preferred_element_type=jnp.float32)
        conv = conv + jnp.concatenate([o_kp1[W:], zrow], axis=0)       # row h+1

        # sse branch: sigmoid(conv1x1(global-average-pool(x))) * x
        gap = jnp.sum(xc, axis=0, keepdims=True) * (1.0 / HW)          # (1, Cp)
        logits = jnp.dot(gap.astype(bf16), wsse_ref[...],
                         preferred_element_type=jnp.float32) + bsse_ref[...]
        attn = jax.nn.sigmoid(logits)                                  # (1, Cp)

        # fuse: (conv1x1 + conv3x3 + sse*x) -> SiLU, all in f32.
        s = conv + b_ref[...] + xc * attn
        o_ref[0] = s * jax.nn.sigmoid(s)

    return parnet_kernel


# ---------------------------------------------------------------------------
# Wrapper: parameter folding / padding + pallas_call
# ---------------------------------------------------------------------------
def _prepare_kernel_params(params, C):
    Cp = ((C + 127) // 128) * 128
    pad_c = Cp - C

    w1, b1 = params["w1"], params["b1"]            # (C,C) in,out ; (1,C)
    w3, b3 = params["w3"], params["b3"]            # (3,3,C,C) ky,kx,in,out
    wsse, bsse = params["wsse"], params["bsse"]    # (C,C) in,out ; (1,C)

    # Exact fusion: conv1x1(+BN) == a 3x3 conv whose only nonzero tap is the
    # center -> add it to the center tap and merge the biases.
    w3 = w3.at[1, 1].add(w1)
    bias = b1 + b3

    w3p = jnp.pad(w3, ((0, 0), (0, 0), (0, pad_c), (0, pad_c)))
    # Per kernel row ky, stack the three kx taps along the input-channel axis.
    wcat = jnp.concatenate([w3p[:, 0], w3p[:, 1], w3p[:, 2]],
                           axis=1).astype(jnp.bfloat16)              # (3,3Cp,Cp)

    wssep = jnp.pad(wsse, ((0, pad_c), (0, pad_c))).astype(jnp.bfloat16)
    biasp = jnp.pad(bias, ((0, 0), (0, pad_c))).astype(jnp.float32)
    bssep = jnp.pad(bsse, ((0, 0), (0, pad_c))).astype(jnp.float32)
    return Cp, wcat, biasp, wssep, bssep


@jax.jit
def parnet_attention(x_nchw, params):
    """x_nchw: (B, C, H, W) float32.  params: dict of module parameters."""
    B, C, H, W = x_nchw.shape
    Cp, wcat, bias, wsse, bsse = _prepare_kernel_params(params, C)

    # NCHW -> NHWC -> (B, H*W, Cp): lane-dense, no in-kernel reshapes needed.
    x = jnp.transpose(x_nchw, (0, 2, 3, 1)).reshape(B, H * W, C)
    if Cp != C:
        x = jnp.pad(x, ((0, 0), (0, 0), (0, Cp - C)))

    out = pl.pallas_call(
        make_parnet_kernel(H, W),
        out_shape=jax.ShapeDtypeStruct((B, H * W, Cp), jnp.float32),
        grid_spec=pltpu.PrefetchScalarGridSpec(
            num_scalar_prefetch=0,
            grid=(B,),
            in_specs=[
                pl.BlockSpec((1, H * W, Cp), lambda b: (b, 0, 0)),
                pl.BlockSpec((3, 3 * Cp, Cp), lambda b: (0, 0, 0)),
                pl.BlockSpec((1, Cp), lambda b: (0, 0)),
                pl.BlockSpec((Cp, Cp), lambda b: (0, 0)),
                pl.BlockSpec((1, Cp), lambda b: (0, 0)),
            ],
            out_specs=pl.BlockSpec((1, H * W, Cp), lambda b: (b, 0, 0)),
        ),
        compiler_params=pltpu.CompilerParams(
            dimension_semantics=("parallel",),
            vmem_limit_bytes=64 * 1024 * 1024,
        ),
    )(x, wcat, bias, wsse, bsse)

    if Cp != C:
        out = out[..., :C]
    out = out.reshape(B, H, W, C)
    return jnp.transpose(out, (0, 3, 1, 2))                # NHWC -> NCHW


# ---------------------------------------------------------------------------
# Deterministic parameter construction (mimics the PyTorch module's shapes,
# BatchNorm2d applied in inference mode and folded into the conv weights).
# ---------------------------------------------------------------------------
def make_params(key, C):
    ks = jax.random.split(key, 12)
    eps = 1e-5

    def bn_fold(kg, kb, km, kv):
        gamma = 1.0 + 0.1 * jax.random.normal(kg, (C,), jnp.float32)
        beta = 0.1 * jax.random.normal(kb, (C,), jnp.float32)
        mean = 0.1 * jax.random.normal(km, (C,), jnp.float32)
        var = jax.random.uniform(kv, (C,), jnp.float32, 0.5, 1.5)
        s = gamma / jnp.sqrt(var + eps)
        t = beta - mean * s
        return s, t

    # conv1x1: torch weight (C_out, C_in, 1, 1) -> (C_in, C_out); bias (C,)
    w1_t = 0.1 * jax.random.normal(ks[0], (C, C), jnp.float32)   # (out, in)
    b1_t = 0.1 * jax.random.normal(ks[1], (C,), jnp.float32)
    s1, t1 = bn_fold(ks[2], ks[3], ks[4], ks[5])
    w1 = w1_t.T * s1[None, :]                                    # (in, out)
    b1 = (b1_t * s1 + t1)[None, :]                               # (1, C)

    # conv3x3: torch weight (C_out, C_in, 3, 3) -> (ky, kx, C_in, C_out)
    w3_t = 0.1 * jax.random.normal(ks[6], (C, C, 3, 3), jnp.float32)
    b3_t = 0.1 * jax.random.normal(ks[7], (C,), jnp.float32)
    s3, t3 = bn_fold(ks[8], ks[9], ks[10], ks[11])
    w3 = jnp.transpose(w3_t, (2, 3, 1, 0)) * s3[None, None, None, :]
    b3 = (b3_t * s3 + t3)[None, :]

    # sse conv1x1 (has bias, no BN)
    key2 = jax.random.fold_in(key, 99)
    k_a, k_b = jax.random.split(key2)
    wsse_t = 0.1 * jax.random.normal(k_a, (C, C), jnp.float32)   # (out, in)
    bsse_t = 0.1 * jax.random.normal(k_b, (C,), jnp.float32)
    wsse = wsse_t.T                                              # (in, out)
    bsse = bsse_t[None, :]

    return dict(w1=w1, b1=b1, w3=w3, b3=b3, wsse=wsse, bsse=bsse)


# ---------------------------------------------------------------------------
# Pure-JAX f32 reference (NCHW) for correctness verification
# ---------------------------------------------------------------------------
def reference(x_nchw, params):
    B, C, H, W = x_nchw.shape
    x = jnp.transpose(x_nchw, (0, 2, 3, 1))                      # NHWC
    xp = jnp.pad(x, ((0, 0), (1, 1), (1, 1), (0, 0)))

    x1 = jnp.einsum("bhwi,io->bhwo", x, params["w1"]) + params["b1"][0]
    x2 = jnp.zeros_like(x1)
    for dy in range(3):
        for dx in range(3):
            x2 = x2 + jnp.einsum("bhwi,io->bhwo",
                                 xp[:, dy:dy + H, dx:dx + W, :],
                                 params["w3"][dy, dx])
    x2 = x2 + params["b3"][0]
    gap = jnp.mean(x, axis=(1, 2))                               # (B, C)
    attn = jax.nn.sigmoid(gap @ params["wsse"] + params["bsse"][0])
    x3 = x * attn[:, None, None, :]
    s = x1 + x2 + x3
    y = s * jax.nn.sigmoid(s)
    return jnp.transpose(y, (0, 3, 1, 2))                        # NCHW


if __name__ == "__main__":
    key = jax.random.PRNGKey(0)
    B, C, H, W = 2, 4, 16, 16                                    # small shapes
    kx_, kp = jax.random.split(key)
    x = jax.random.normal(kx_, (B, C, H, W), jnp.float32)
    params = make_params(kp, C)

    y = parnet_attention(x, params)
    y = jax.block_until_ready(y)

    y_ref = reference(x, params)
    # kernel uses bf16 MXU operands with f32 accumulation -> loose tolerance
    np.testing.assert_allclose(np.asarray(y), np.asarray(y_ref),
                               rtol=3e-2, atol=3e-2)
    print("KERNEL_OK")
</pallas_src>

<mosaic_0001>
module attributes {stable_mosaic.version = 11 : i64} {
  func.func @parnet_kernel(%arg0: i32, %arg1: memref<1x256x128xf32, #tpu.memory_space<vmem>>, %arg2: memref<3x384x128xbf16, #tpu.memory_space<vmem>>, %arg3: memref<1x128xf32, #tpu.memory_space<vmem>>, %arg4: memref<128x128xbf16, #tpu.memory_space<vmem>>, %arg5: memref<1x128xf32, #tpu.memory_space<vmem>>, %arg6: memref<1x256x128xf32, #tpu.memory_space<vmem>>) attributes {dimension_semantics = [#tpu.dimension_semantics<parallel>], iteration_bounds = array<i64: 2>, scalar_prefetch = 0 : i64, scratch_operands = 0 : i64, tpu.core_type = #tpu.core_type<tc>, window_params = [{transform_indices = @transform_0, window_bounds = array<i64: 1, 256, 128>}, {pipeline_mode = #tpu.pipeline_mode<synchronous>, transform_indices = @transform_1, window_bounds = array<i64: 3, 384, 128>}, {pipeline_mode = #tpu.pipeline_mode<synchronous>, transform_indices = @transform_2, window_bounds = array<i64: 1, 128>}, {pipeline_mode = #tpu.pipeline_mode<synchronous>, transform_indices = @transform_3, window_bounds = array<i64: 128, 128>}, {pipeline_mode = #tpu.pipeline_mode<synchronous>, transform_indices = @transform_4, window_bounds = array<i64: 1, 128>}, {transform_indices = @transform_5, window_bounds = array<i64: 1, 256, 128>}]} {
    %c0 = arith.constant 0 : index
    %c0_0 = arith.constant 0 : index
    %c0_1 = arith.constant 0 : index
    %0 = vector.load %arg1[%c0, %c0_0, %c0_1] : memref<1x256x128xf32, #tpu.memory_space<vmem>>, vector<1x256x128xf32>
    %1 = vector.shape_cast %0 : vector<1x256x128xf32> to vector<256x128xf32>
    %2 = tpu.iota {dimensions = array<i32: 0>} : vector<256x128xi32>
    %c16_i32 = arith.constant 16 : i32
    %3 = vector.broadcast %c16_i32 : i32 to vector<256x128xi32>
    %4 = arith.remsi %2, %3 : vector<256x128xi32>
    %c15_i32 = arith.constant 15 : i32
    %5 = vector.broadcast %c15_i32 : i32 to vector<256x128xi32>
    %6 = arith.cmpi slt, %4, %5 : vector<256x128xi32>
    %7 = arith.extui %6 : vector<256x128xi1> to vector<256x128xi32>
    %8 = arith.sitofp %7 : vector<256x128xi32> to vector<256x128xf32>
    %c0_i32 = arith.constant 0 : i32
    %9 = vector.broadcast %c0_i32 : i32 to vector<256x128xi32>
    %10 = arith.cmpi sgt, %4, %9 : vector<256x128xi32>
    %11 = arith.extui %10 : vector<256x128xi1> to vector<256x128xi32>
    %12 = arith.sitofp %11 : vector<256x128xi32> to vector<256x128xf32>
    %13 = arith.mulf %1, %8 : vector<256x128xf32>
    %c1_i32 = arith.constant 1 : i32
    %14 = tpu.dynamic_rotate %13 by %c1_i32 dim 0 : vector<256x128xf32>, i32 -> vector<256x128xf32>
    %15 = arith.mulf %1, %12 : vector<256x128xf32>
    %c255_i32 = arith.constant 255 : i32
    %16 = tpu.dynamic_rotate %15 by %c255_i32 dim 0 : vector<256x128xf32>, i32 -> vector<256x128xf32>
    %17 = arith.truncf %14 : vector<256x128xf32> to vector<256x128xbf16>
    %18 = arith.truncf %1 : vector<256x128xf32> to vector<256x128xbf16>
    %19 = arith.truncf %16 : vector<256x128xf32> to vector<256x128xbf16>
    %20 = tpu.concatenate %17, %18, %19 in 1 : vector<256x128xbf16>, vector<256x128xbf16>, vector<256x128xbf16> -> vector<256x384xbf16>
    %c1 = arith.constant 1 : index
    %c0_2 = arith.constant 0 : index
    %c0_3 = arith.constant 0 : index
    %21 = vector.load %arg2[%c1, %c0_2, %c0_3] : memref<3x384x128xbf16, #tpu.memory_space<vmem>>, vector<1x384x128xbf16>
    %22 = vector.shape_cast %21 : vector<1x384x128xbf16> to vector<384x128xbf16>
    %cst = arith.constant dense<0.000000e+00> : vector<256x128xf32>
    %23 = tpu.matmul %20, %22, %cst {dimension_numbers = #tpu.dot_dimension_numbers<[1], [0], [0], [1], [0, 0, 1, 1], [], []>} : vector<256x384xbf16>, vector<384x128xbf16>, vector<256x128xf32> -> vector<256x128xf32>
    %cst_4 = arith.constant 0.000000e+00 : f32
    %24 = vector.broadcast %cst_4 : f32 to vector<16x128xf32>
    %c0_5 = arith.constant 0 : index
    %c0_6 = arith.constant 0 : index
    %c0_7 = arith.constant 0 : index
    %25 = vector.load %arg2[%c0_5, %c0_6, %c0_7] : memref<3x384x128xbf16, #tpu.memory_space<vmem>>, vector<1x384x128xbf16>
    %26 = vector.shape_cast %25 : vector<1x384x128xbf16> to vector<384x128xbf16>
    %cst_8 = arith.constant dense<0.000000e+00> : vector<256x128xf32>
    %27 = tpu.matmul %20, %26, %cst_8 {dimension_numbers = #tpu.dot_dimension_numbers<[1], [0], [0], [1], [0, 0, 1, 1], [], []>} : vector<256x384xbf16>, vector<384x128xbf16>, vector<256x128xf32> -> vector<256x128xf32>
    %28 = vector.extract_strided_slice %27 {offsets = [0, 0], sizes = [240, 128], strides = [1, 1]} : vector<256x128xf32> to vector<240x128xf32>
    %29 = tpu.concatenate %24, %28 in 0 : vector<16x128xf32>, vector<240x128xf32> -> vector<256x128xf32>
    %30 = arith.addf %23, %29 : vector<256x128xf32>
    %c2 = arith.constant 2 : index
    %c0_9 = arith.constant 0 : index
    %c0_10 = arith.constant 0 : index
    %31 = vector.load %arg2[%c2, %c0_9, %c0_10] : memref<3x384x128xbf16, #tpu.memory_space<vmem>>, vector<1x384x128xbf16>
    %32 = vector.shape_cast %31 : vector<1x384x128xbf16> to vector<384x128xbf16>
    %cst_11 = arith.constant dense<0.000000e+00> : vector<256x128xf32>
    %33 = tpu.matmul %20, %32, %cst_11 {dimension_numbers = #tpu.dot_dimension_numbers<[1], [0], [0], [1], [0, 0, 1, 1], [], []>} : vector<256x384xbf16>, vector<384x128xbf16>, vector<256x128xf32> -> vector<256x128xf32>
    %34 = vector.extract_strided_slice %33 {offsets = [16, 0], sizes = [240, 128], strides = [1, 1]} : vector<256x128xf32> to vector<240x128xf32>
    %35 = tpu.concatenate %34, %24 in 0 : vector<240x128xf32>, vector<16x128xf32> -> vector<256x128xf32>
    %36 = arith.addf %30, %35 : vector<256x128xf32>
    %cst_12 = arith.constant dense<0.000000e+00> : vector<128xf32>
    %37 = vector.multi_reduction <add>, %1, %cst_12 [0] : vector<256x128xf32> to vector<128xf32>
    %38 = vector.shape_cast %37 : vector<128xf32> to vector<1x128xf32>
    %cst_13 = arith.constant 3.906250e-03 : f32
    %39 = vector.broadcast %cst_13 : f32 to vector<1x128xf32>
    %40 = arith.mulf %38, %39 : vector<1x128xf32>
    %41 = arith.truncf %40 : vector<1x128xf32> to vector<1x128xbf16>
    %c0_14 = arith.constant 0 : index
    %c0_15 = arith.constant 0 : index
    %42 = vector.load %arg4[%c0_14, %c0_15] : memref<128x128xbf16, #tpu.memory_space<vmem>>, vector<128x128xbf16>
    %cst_16 = arith.constant dense<0.000000e+00> : vector<1x128xf32>
    %43 = tpu.matmul %41, %42, %cst_16 {dimension_numbers = #tpu.dot_dimension_numbers<[1], [0], [0], [1], [0, 0, 1, 1], [], []>} : vector<1x128xbf16>, vector<128x128xbf16>, vector<1x128xf32> -> vector<1x128xf32>
    %c0_17 = arith.constant 0 : index
    %c0_18 = arith.constant 0 : index
    %44 = vector.load %arg5[%c0_17, %c0_18] : memref<1x128xf32, #tpu.memory_space<vmem>>, vector<1x128xf32>
    %45 = arith.addf %43, %44 : vector<1x128xf32>
    %46 = arith.negf %45 : vector<1x128xf32>
    %47 = math.exp %46 : vector<1x128xf32>
    %cst_19 = arith.constant 1.000000e+00 : f32
    %48 = vector.broadcast %cst_19 : f32 to vector<1x128xf32>
    %49 = arith.addf %48, %47 : vector<1x128xf32>
    %50 = arith.divf %48, %49 : vector<1x128xf32>
    %c0_20 = arith.constant 0 : index
    %c0_21 = arith.constant 0 : index
    %51 = vector.load %arg3[%c0_20, %c0_21] : memref<1x128xf32, #tpu.memory_space<vmem>>, vector<1x128xf32>
    %52 = vector.broadcast %51 : vector<1x128xf32> to vector<256x128xf32>
    %53 = arith.addf %36, %52 : vector<256x128xf32>
    %54 = vector.broadcast %50 : vector<1x128xf32> to vector<256x128xf32>
    %55 = arith.mulf %1, %54 : vector<256x128xf32>
    %56 = arith.addf %53, %55 : vector<256x128xf32>
    %57 = arith.negf %56 : vector<256x128xf32>
    %58 = math.exp %57 : vector<256x128xf32>
    %cst_22 = arith.constant 1.000000e+00 : f32
    %59 = vector.broadcast %cst_22 : f32 to vector<256x128xf32>
    %60 = arith.addf %59, %58 : vector<256x128xf32>
    %61 = arith.divf %59, %60 : vector<256x128xf32>
    %62 = arith.mulf %56, %61 : vector<256x128xf32>
    %c0_23 = arith.constant 0 : index
    %c0_24 = arith.constant 0 : index
    %c0_25 = arith.constant 0 : index
    %63 = vector.load %arg6[%c0_23, %c0_24, %c0_25] : memref<1x256x128xf32, #tpu.memory_space<vmem>>, vector<1x256x128xf32>
    %64 = vector.shape_cast %63 : vector<1x256x128xf32> to vector<256x128xf32>
    %65 = vector.shape_cast %62 : vector<256x128xf32> to vector<1x256x128xf32>
    tpu.vector_store %arg6[%c0_23, %c0_24, %c0_25], %65 {strides = array<i32>} : memref<1x256x128xf32, #tpu.memory_space<vmem>>, vector<1x256x128xf32>,
    return
  }
  func.func @transform_0(%arg0: i32) -> (i32, i32, i32) {
    %c0_i32 = arith.constant 0 : i32
    %c0_i32_0 = arith.constant 0 : i32
    %c0_i32_1 = arith.constant 0 : i32
    return %arg0, %c0_i32, %c0_i32_0 : i32, i32, i32
  }
  func.func @transform_1(%arg0: i32) -> (i32, i32, i32) {
    %c0_i32 = arith.constant 0 : i32
    %c0_i32_0 = arith.constant 0 : i32
    %c0_i32_1 = arith.constant 0 : i32
    %c0_i32_2 = arith.constant 0 : i32
    return %c0_i32, %c0_i32_0, %c0_i32_1 : i32, i32, i32
  }
  func.func @transform_2(%arg0: i32) -> (i32, i32) {
    %c0_i32 = arith.constant 0 : i32
    %c0_i32_0 = arith.constant 0 : i32
    %c0_i32_1 = arith.constant 0 : i32
    return %c0_i32, %c0_i32_0 : i32, i32
  }
  func.func @transform_3(%arg0: i32) -> (i32, i32) {
    %c0_i32 = arith.constant 0 : i32
    %c0_i32_0 = arith.constant 0 : i32
    %c0_i32_1 = arith.constant 0 : i32
    return %c0_i32, %c0_i32_0 : i32, i32
  }
  func.func @transform_4(%arg0: i32) -> (i32, i32) {
    %c0_i32 = arith.constant 0 : i32
    %c0_i32_0 = arith.constant 0 : i32
    %c0_i32_1 = arith.constant 0 : i32
    return %c0_i32, %c0_i32_0 : i32, i32
  }
  func.func @transform_5(%arg0: i32) -> (i32, i32, i32) {
    %c0_i32 = arith.constant 0 : i32
    %c0_i32_0 = arith.constant 0 : i32
    %c0_i32_1 = arith.constant 0 : i32
    return %arg0, %c0_i32, %c0_i32_0 : i32, i32, i32
  }
}

</mosaic_0001>

<llo_original>
// kernel: parnet_attention.1
$region0: #{parnet_attention.1}
  #allocation0 [shape = 'u32[]', space=smem, size = 0x4, offset = 0x4, fixed_abs, tag = 'smem constant byte address 0x4 - core index']
  #allocation1 [shape = 'u32[144,128]{1,0:T(1,128)}', space=vmem, size = 0x12000, scoped, tag = 'internal scratch']
  %s0 = inlined_call_operand.vmem [shape: f32[2,256,128], index: 0, kind: input, shape index: {}]
  %s1 = inlined_call_operand.vmem [shape: bf16[3,384,128], index: 1, kind: input, shape index: {}]
  %s2 = inlined_call_operand.vmem [shape: f32[1,128], index: 2, kind: input, shape index: {}]
  %s3 = inlined_call_operand.vmem [shape: bf16[128,128], index: 3, kind: input, shape index: {}]
  %s4 = inlined_call_operand.vmem [shape: f32[1,128], index: 4, kind: input, shape index: {}]
  %s5 = inlined_call_operand.vmem [shape: f32[2,256,128], index: 5, kind: output, shape index: {}]
  %s6 = sld [smem:[#allocation0]]
  $region53: #{parnet_attention.1} parent=0
    _
  %s8 = ssub.s32 1, %s6
  %s9 = scalar_select 0, %s8, %s6
  loop: start=0, step=1, limit=4
  $region2: #{parnet_attention.1} parent=0 // loop_pre_header
    _
  $region3: #{parnet_attention.1} parent=0 // loop_header
    %s11 = sphi 0, %s15
    %p12 = scmp.ge.s32.totalorder %s11, 4
    %s21 = sphi 0, %s23
    %s24 = sphi 0, %s21
    %s25 = sphi 0, %s24
    %s41 = sphi 0, %s25
    %s45 = sphi 0, %s45
    %s47 = sphi 0, %s45
    %s48 = sphi 0, %s47
    %s62 = sphi 0, %s48
    %s66 = sphi 0, %s66
    %s68 = sphi 0, %s66
    %s69 = sphi 0, %s68
    %s83 = sphi 0, %s69
    %s87 = sphi 0, %s87
    %s89 = sphi 0, %s87
    %s90 = sphi 0, %s89
    %s104 = sphi 0, %s90
    %s108 = sphi 0, %s108
    %s110 = sphi 0, %s108
    %s111 = sphi 0, %s110
    %s125 = sphi 0, %s111
    %s131 = sphi 0, %s133
    %s134 = sphi 0, %s131
    %s135 = sphi 0, %s134
    %s151 = sphi 0, %s135
  $region4: #{parnet_attention.1} parent=0 // loop_header_branch
    %14 = sbr.rel (%p12) target = $region8
  $region5: #{parnet_attention.1} parent=0 // loop_body
    %s16 = ssub.s32 %s11, 1
    %s17 = ssub.s32 %s11, 2
    %s18 = sadd.s32 %s11, 1
    %s19 = ssub.s32 %s11, %s18
    %p20 = scmp.eq.s32.totalorder %s19, 0
    %s22 = sadd.s32 %s21, 1
    %s23 = scalar_select %p20, %s21, %s22
    %p26 = pneg %p20
    %p27 = scmp.eq.s32.totalorder %s11, 1
    %p28 = por %p26, %p27
    %p29 = scmp.ne.s32.totalorder %s21, %s24
    %p30 = scmp.eq.s32.totalorder %s11, 0
    %p31 = por %p29, %p30
    %p32 = scmp.ne.s32.totalorder %s21, %s24
    %p33 = scmp.eq.s32.totalorder %s16, 1
    %p34 = por %p32, %p33
    %p35 = scmp.ne.s32.totalorder %s24, %s25
    %p36 = scmp.eq.s32.totalorder %s16, 0
    %p37 = por %p35, %p36
    %p38 = scmp.ne.s32.totalorder %s24, %s25
    %p39 = scmp.eq.s32.totalorder %s17, 1
    %p40 = por %p38, %p39
    %p42 = scmp.ne.s32.totalorder %s25, %s41
    %p43 = scmp.eq.s32.totalorder %s17, 0
    %p44 = por %p42, %p43
    %s46 = sadd.s32 %s45, 1
    %p49 = scmp.eq.s32.totalorder %s11, 1
    %p50 = scmp.ne.s32.totalorder %s45, %s47
    %p51 = scmp.eq.s32.totalorder %s11, 0
    %p52 = por %p50, %p51
    %p53 = scmp.ne.s32.totalorder %s45, %s47
    %p54 = scmp.eq.s32.totalorder %s16, 1
    %p55 = por %p53, %p54
    %p56 = scmp.ne.s32.totalorder %s47, %s48
    %p57 = scmp.eq.s32.totalorder %s16, 0
    %p58 = por %p56, %p57
    %p59 = scmp.ne.s32.totalorder %s47, %s48
    %p60 = scmp.eq.s32.totalorder %s17, 1
    %p61 = por %p59, %p60
    %p63 = scmp.ne.s32.totalorder %s48, %s62
    %p64 = scmp.eq.s32.totalorder %s17, 0
    %p65 = por %p63, %p64
    %s67 = sadd.s32 %s66, 1
    %p70 = scmp.eq.s32.totalorder %s11, 1
    %p71 = scmp.ne.s32.totalorder %s66, %s68
    %p72 = scmp.eq.s32.totalorder %s11, 0
    %p73 = por %p71, %p72
    %p74 = scmp.ne.s32.totalorder %s66, %s68
    %p75 = scmp.eq.s32.totalorder %s16, 1
    %p76 = por %p74, %p75
    %p77 = scmp.ne.s32.totalorder %s68, %s69
    %p78 = scmp.eq.s32.totalorder %s16, 0
    %p79 = por %p77, %p78
    %p80 = scmp.ne.s32.totalorder %s68, %s69
    %p81 = scmp.eq.s32.totalorder %s17, 1
    %p82 = por %p80, %p81
    %p84 = scmp.ne.s32.totalorder %s69, %s83
    %p85 = scmp.eq.s32.totalorder %s17, 0
    %p86 = por %p84, %p85
    %s88 = sadd.s32 %s87, 1
    %p91 = scmp.eq.s32.totalorder %s11, 1
    %p92 = scmp.ne.s32.totalorder %s87, %s89
    %p93 = scmp.eq.s32.totalorder %s11, 0
    %p94 = por %p92, %p93
    %p95 = scmp.ne.s32.totalorder %s87, %s89
    %p96 = scmp.eq.s32.totalorder %s16, 1
    %p97 = por %p95, %p96
    %p98 = scmp.ne.s32.totalorder %s89, %s90
    %p99 = scmp.eq.s32.totalorder %s16, 0
    %p100 = por %p98, %p99
    %p101 = scmp.ne.s32.totalorder %s89, %s90
    %p102 = scmp.eq.s32.totalorder %s17, 1
    %p103 = por %p101, %p102
    %p105 = scmp.ne.s32.totalorder %s90, %s104
    %p106 = scmp.eq.s32.totalorder %s17, 0
    %p107 = por %p105, %p106
    %s109 = sadd.s32 %s108, 1
    %p112 = scmp.eq.s32.totalorder %s11, 1
    %p113 = scmp.ne.s32.totalorder %s108, %s110
    %p114 = scmp.eq.s32.totalorder %s11, 0
    %p115 = por %p113, %p114
    %p116 = scmp.ne.s32.totalorder %s108, %s110
    %p117 = scmp.eq.s32.totalorder %s16, 1
    %p118 = por %p116, %p117
    %p119 = scmp.ne.s32.totalorder %s110, %s111
    %p120 = scmp.eq.s32.totalorder %s16, 0
    %p121 = por %p119, %p120
    %p122 = scmp.ne.s32.totalorder %s110, %s111
    %p123 = scmp.eq.s32.totalorder %s17, 1
    %p124 = por %p122, %p123
    %p126 = scmp.ne.s32.totalorder %s111, %s125
    %p127 = scmp.eq.s32.totalorder %s17, 0
    %p128 = por %p126, %p127
    %s129 = ssub.s32 %s11, %s18
    %p130 = scmp.eq.s32.totalorder %s129, 0
    %s132 = sadd.s32 %s131, 1
    %s133 = scalar_select %p130, %s131, %s132
    %p136 = pneg %p130
    %p137 = scmp.eq.s32.totalorder %s11, 1
    %p138 = por %p136, %p137
    %p139 = scmp.ne.s32.totalorder %s131, %s134
    %p140 = scmp.eq.s32.totalorder %s11, 0
    %p141 = por %p139, %p140
    %p142 = scmp.ne.s32.totalorder %s131, %s134
    %p143 = scmp.eq.s32.totalorder %s16, 1
    %p144 = por %p142, %p143
    %p145 = scmp.ne.s32.totalorder %s134, %s135
    %p146 = scmp.eq.s32.totalorder %s16, 0
    %p147 = por %p145, %p146
    %p148 = scmp.ne.s32.totalorder %s134, %s135
    %p149 = scmp.eq.s32.totalorder %s17, 1
    %p150 = por %p148, %p149
    %p152 = scmp.ne.s32.totalorder %s135, %s151
    %p153 = scmp.eq.s32.totalorder %s17, 0
    %p154 = por %p152, %p153
    %p155 = scmp.le.s32.totalorder 1, %s11
    %p156 = scmp.lt.s32.totalorder %s11, 3
    %p157 = pnand %p155, %p156
    %p158 = pneg %p157
    // Predicated region
    $region9: #{parnet_attention.1} parent=5 // pred_check
      _
    $region10: #{parnet_attention.1} parent=5 // pred_check_branch
      %160 = sbr.rel (%p157) target = $region12
    $region11: #{parnet_attention.1} parent=5 // pred_region
      %s161 = ssub.s32 %s11, 1
      // Predicated region
      $region13: #{parnet_attention.1} parent=11 // pred_check
        %p162 = pneg %p58
      $region14: #{parnet_attention.1} parent=11 // pred_check_branch
        %164 = sbr.rel (%p162) target = $region16
      $region15: #{parnet_attention.1} parent=11 // pred_region
        _
      $region16: #{parnet_attention.1} parent=11 // pred_fallthru
        _
      // Predicated region
      $region17: #{parnet_attention.1} parent=11 // pred_check
        %p165 = pneg %p79
      $region18: #{parnet_attention.1} parent=11 // pred_check_branch
        %167 = sbr.rel (%p165) target = $region20
      $region19: #{parnet_attention.1} parent=11 // pred_region
        _
      $region20: #{parnet_attention.1} parent=11 // pred_fallthru
        _
      // Predicated region
      $region21: #{parnet_attention.1} parent=11 // pred_check
        %p168 = pneg %p100
      $region22: #{parnet_attention.1} parent=11 // pred_check_branch
        %170 = sbr.rel (%p168) target = $region24
      $region23: #{parnet_attention.1} parent=11 // pred_region
        _
      $region24: #{parnet_attention.1} parent=11 // pred_fallthru
        _
      // Predicated region
      $region25: #{parnet_attention.1} parent=11 // pred_check
        %p171 = pneg %p121
      $region26: #{parnet_attention.1} parent=11 // pred_check_branch
        %173 = sbr.rel (%p171) target = $region28
      $region27: #{parnet_attention.1} parent=11 // pred_region
        _
      $region28: #{parnet_attention.1} parent=11 // pred_fallthru
        _
    $region12: #{parnet_attention.1} parent=5 // pred_fallthru
      _
    %p174 = scmp.lt.s32.totalorder %s11, 2
    // Predicated region
    $region29: #{parnet_attention.1} parent=5 // pred_check
      %p175 = pneg %p174
    $region30: #{parnet_attention.1} parent=5 // pred_check_branch
      %177 = sbr.rel (%p175) target = $region32
    $region31: #{parnet_attention.1} parent=5 // pred_region
      // Predicated region
      $region33: #{parnet_attention.1} parent=31 // pred_check
        %p178 = pneg %p31
      $region34: #{parnet_attention.1} parent=31 // pred_check_branch
        %180 = sbr.rel (%p178) target = $region36
      $region35: #{parnet_attention.1} parent=31 // pred_region
        %p181 = scmp.lt.s32.totalorder %s11, 1
        %s182 = scalar_select %p181, %s11, 1
        %s183 = smul.addr %s182, 32
        %s184 = smul.addr %s183, 8
        %s185 = scalar_lea.vmem %s0, %s184
      $region36: #{parnet_attention.1} parent=31 // pred_fallthru
        _
    $region32: #{parnet_attention.1} parent=5 // pred_fallthru
      _
    %p186 = scmp.le.s32.totalorder 1, %s11
    %p187 = scmp.lt.s32.totalorder %s11, 3
    %p188 = pnand %p186, %p187
    %p189 = pneg %p188
    // Predicated region
    $region37: #{parnet_attention.1} parent=5 // pred_check
      _
    $region38: #{parnet_attention.1} parent=5 // pred_check_branch
      %191 = sbr.rel (%p188) target = $region40
    $region39: #{parnet_attention.1} parent=5 // pred_region
      %s192 = ssub.s32 %s11, 1
      %p193 = scmp.lt.s32.totalorder %s16, 1
      %s194 = scalar_select %p193, %s16, 1
      %s195 = smul.addr %s194, 32
      %s196 = smul.addr %s195, 8
      %s197 = scalar_lea.vmem %s0, %s196
      %p198 = pneg %p37
      %p199 = pneg %p34
      %p200 = pneg %p58
      %p201 = pneg %p55
      %p202 = pneg %p79
      %p203 = pneg %p76
      %p204 = pneg %p100
      %p205 = pneg %p97
      %p206 = pneg %p121
      %p207 = pneg %p118
      %p208 = pneg %p147
      %p209 = pneg %p144
      %p210 = scmp.lt.s32.totalorder %s16, 1
      %s211 = scalar_select %p210, %s16, 1
      %s212 = smul.addr %s211, 32
      %s213 = smul.addr %s212, 8
      %s214 = scalar_lea.vmem %s5, %s213
      %p215 = scmp.lt.s32.totalorder %s16, 1
      %s216 = scalar_select %p215, %s16, 1
      %s217 = smul.addr %s216, 32
      %s218 = smul.addr %s217, 8
      %s219 = scalar_lea.vmem %s0, %s218
      %p220 = scmp.lt.s32.totalorder %s16, 1
      %s221 = scalar_select %p220, %s16, 1
      %s222 = smul.addr %s221, 32
      %s223 = smul.addr %s222, 8
      %s224 = scalar_lea.vmem %s5, %s223
      %v226 = vld [vmem:[%s219] sm:$0xff]
      %v227 = vld [vmem:[%s219 + $0x8] sm:$0xff]
      %v228 = vld [vmem:[%s219 + $0x10] sm:$0xff]
      %v229 = vld [vmem:[%s219 + $0x18] sm:$0xff]
      %v230 = vld [vmem:[%s219 + $0x20] sm:$0xff]
      %v231 = vld [vmem:[%s219 + $0x28] sm:$0xff]
      %v232 = vld [vmem:[%s219 + $0x30] sm:$0xff]
      %v233 = vld [vmem:[%s219 + $0x38] sm:$0xff]
      %v234 = vld [vmem:[%s219 + $0x40] sm:$0xff]
      %v235 = vld [vmem:[%s219 + $0x48] sm:$0xff]
      %v236 = vld [vmem:[%s219 + $0x50] sm:$0xff]
      %v237 = vld [vmem:[%s219 + $0x58] sm:$0xff]
      %v238 = vld [vmem:[%s219 + $0x60] sm:$0xff]
      %v239 = vld [vmem:[%s219 + $0x68] sm:$0xff]
      %v240 = vld [vmem:[%s219 + $0x70] sm:$0xff]
      %v241 = vld [vmem:[%s219 + $0x78] sm:$0xff]
      %v242 = vld [vmem:[%s219 + $0x80] sm:$0xff]
      %v243 = vld [vmem:[%s219 + $0x88] sm:$0xff]
      %v244 = vld [vmem:[%s219 + $0x90] sm:$0xff]
      %v245 = vld [vmem:[%s219 + $0x98] sm:$0xff]
      %v246 = vld [vmem:[%s219 + $0xa0] sm:$0xff]
      %v247 = vld [vmem:[%s219 + $0xa8] sm:$0xff]
      %v248 = vld [vmem:[%s219 + $0xb0] sm:$0xff]
      %v249 = vld [vmem:[%s219 + $0xb8] sm:$0xff]
      %v250 = vld [vmem:[%s219 + $0xc0] sm:$0xff]
      %v251 = vld [vmem:[%s219 + $0xc8] sm:$0xff]
      %v252 = vld [vmem:[%s219 + $0xd0] sm:$0xff]
      %v253 = vld [vmem:[%s219 + $0xd8] sm:$0xff]
      %v254 = vld [vmem:[%s219 + $0xe0] sm:$0xff]
      %v255 = vld [vmem:[%s219 + $0xe8] sm:$0xff]
      %v256 = vld [vmem:[%s219 + $0xf0] sm:$0xff]
      %v257 = vld [vmem:[%s219 + $0xf8] sm:$0xff]
      %v258 = vlaneseq
      %v259 = vshrl.u32 %v258, 7
      %v260 = vadd.s32 %v259, 8
      %v261 = vadd.s32 %v259, 16
      %v262 = vadd.s32 %v259, 24
      %v263 = vadd.s32 %v259, 32
      %v264 = vadd.s32 %v259, 40
      %v265 = vadd.s32 %v259, 48
      %v266 = vadd.s32 %v259, 56
      %v267 = vadd.s32 %v259, 64
      %v268 = vadd.s32 %v259, 72
      %v269 = vadd.s32 %v259, 80
      %v270 = vadd.s32 %v259, 88
      %v271 = vadd.s32 %v259, 96
      %v272 = vadd.s32 %v259, 104
      %v273 = vadd.s32 %v259, 112
      %v274 = vadd.s32 %v259, 120
      %v275 = vadd.s32 %v259, 128
      %v276 = vadd.s32 %v259, 136
      %v277 = vadd.s32 %v259, 144
      %v278 = vadd.s32 %v259, 152
      %v279 = vadd.s32 %v259, 160
      %v280 = vadd.s32 %v259, 168
      %v281 = vadd.s32 %v259, 176
      %v282 = vadd.s32 %v259, 184
      %v283 = vadd.s32 %v259, 192
      %v284 = vadd.s32 %v259, 200
      %v285 = vadd.s32 %v259, 208
      %v286 = vadd.s32 %v259, 216
      %v287 = vadd.s32 %v259, 224
      %v288 = vadd.s32 %v259, 232
      %v289 = vadd.s32 %v259, 240
      %v290 = vadd.s32 %v259, 248
      %vm291 = vcmp.lt.s32.totalorder %v259, 0
      %v292 = vsub.s32 0, %v259
      %v293 = vsel %vm291, %v292, %v259
      %v294 = vshrl.u32 %v293, 4
      %v295 = vand.u32 %v293, 15
      %v296 = vsub.s32 0, %v295
      %v297 = vsel %vm291, %v296, %v295
      %vm298 = vcmp.lt.s32.totalorder %v260, 0
      %v299 = vsub.s32 0, %v260
      %v300 = vsel %vm298, %v299, %v260
      %v301 = vshrl.u32 %v300, 4
      %v302 = vand.u32 %v300, 15
      %v303 = vsub.s32 0, %v302
      %v304 = vsel %vm298, %v303, %v302
      %vm305 = vcmp.lt.s32.totalorder %v261, 0
      %v306 = vsub.s32 0, %v261
      %v307 = vsel %vm305, %v306, %v261
      %v308 = vshrl.u32 %v307, 4
      %v309 = vand.u32 %v307, 15
      %v310 = vsub.s32 0, %v309
      %v311 = vsel %vm305, %v310, %v309
      %vm312 = vcmp.lt.s32.totalorder %v262, 0
      %v313 = vsub.s32 0, %v262
      %v314 = vsel %vm312, %v313, %v262
      %v315 = vshrl.u32 %v314, 4
      %v316 = vand.u32 %v314, 15
      %v317 = vsub.s32 0, %v316
      %v318 = vsel %vm312, %v317, %v316
      %vm319 = vcmp.lt.s32.totalorder %v263, 0
      %v320 = vsub.s32 0, %v263
      %v321 = vsel %vm319, %v320, %v263
      %v322 = vshrl.u32 %v321, 4
      %v323 = vand.u32 %v321, 15
      %v324 = vsub.s32 0, %v323
      %v325 = vsel %vm319, %v324, %v323
      %vm326 = vcmp.lt.s32.totalorder %v264, 0
      %v327 = vsub.s32 0, %v264
      %v328 = vsel %vm326, %v327, %v264
      %v329 = vshrl.u32 %v328, 4
      %v330 = vand.u32 %v328, 15
      %v331 = vsub.s32 0, %v330
      %v332 = vsel %vm326, %v331, %v330
      %vm333 = vcmp.lt.s32.totalorder %v265, 0
      %v334 = vsub.s32 0, %v265
      %v335 = vsel %vm333, %v334, %v265
      %v336 = vshrl.u32 %v335, 4
      %v337 = vand.u32 %v335, 15
      %v338 = vsub.s32 0, %v337
      %v339 = vsel %vm333, %v338, %v337
      %vm340 = vcmp.lt.s32.totalorder %v266, 0
      %v341 = vsub.s32 0, %v266
      %v342 = vsel %vm340, %v341, %v266
      %v343 = vshrl.u32 %v342, 4
      %v344 = vand.u32 %v342, 15
      %v345 = vsub.s32 0, %v344
      %v346 = vsel %vm340, %v345, %v344
      %vm347 = vcmp.lt.s32.totalorder %v267, 0
      %v348 = vsub.s32 0, %v267
      %v349 = vsel %vm347, %v348, %v267
      %v350 = vshrl.u32 %v349, 4
      %v351 = vand.u32 %v349, 15
      %v352 = vsub.s32 0, %v351
      %v353 = vsel %vm347, %v352, %v351
      %vm354 = vcmp.lt.s32.totalorder %v268, 0
      %v355 = vsub.s32 0, %v268
      %v356 = vsel %vm354, %v355, %v268
      %v357 = vshrl.u32 %v356, 4
      %v358 = vand.u32 %v356, 15
      %v359 = vsub.s32 0, %v358
      %v360 = vsel %vm354, %v359, %v358
      %vm361 = vcmp.lt.s32.totalorder %v269, 0
      %v362 = vsub.s32 0, %v269
      %v363 = vsel %vm361, %v362, %v269
      %v364 = vshrl.u32 %v363, 4
      %v365 = vand.u32 %v363, 15
      %v366 = vsub.s32 0, %v365
      %v367 = vsel %vm361, %v366, %v365
      %vm368 = vcmp.lt.s32.totalorder %v270, 0
      %v369 = vsub.s32 0, %v270
      %v370 = vsel %vm368, %v369, %v270
      %v371 = vshrl.u32 %v370, 4
      %v372 = vand.u32 %v370, 15
      %v373 = vsub.s32 0, %v372
      %v374 = vsel %vm368, %v373, %v372
      %vm375 = vcmp.lt.s32.totalorder %v271, 0
      %v376 = vsub.s32 0, %v271
      %v377 = vsel %vm375, %v376, %v271
      %v378 = vshrl.u32 %v377, 4
      %v379 = vand.u32 %v377, 15
      %v380 = vsub.s32 0, %v379
      %v381 = vsel %vm375, %v380, %v379
      %vm382 = vcmp.lt.s32.totalorder %v272, 0
      %v383 = vsub.s32 0, %v272
      %v384 = vsel %vm382, %v383, %v272
      %v385 = vshrl.u32 %v384, 4
      %v386 = vand.u32 %v384, 15
      %v387 = vsub.s32 0, %v386
      %v388 = vsel %vm382, %v387, %v386
      %vm389 = vcmp.lt.s32.totalorder %v273, 0
      %v390 = vsub.s32 0, %v273
      %v391 = vsel %vm389, %v390, %v273
      %v392 = vshrl.u32 %v391, 4
      %v393 = vand.u32 %v391, 15
      %v394 = vsub.s32 0, %v393
      %v395 = vsel %vm389, %v394, %v393
      %vm396 = vcmp.lt.s32.totalorder %v274, 0
      %v397 = vsub.s32 0, %v274
      %v398 = vsel %vm396, %v397, %v274
      %v399 = vshrl.u32 %v398, 4
      %v400 = vand.u32 %v398, 15
      %v401 = vsub.s32 0, %v400
      %v402 = vsel %vm396, %v401, %v400
      %vm403 = vcmp.lt.s32.totalorder %v275, 0
      %v404 = vsub.s32 0, %v275
      %v405 = vsel %vm403, %v404, %v275
      %v406 = vshrl.u32 %v405, 4
      %v407 = vand.u32 %v405, 15
      %v408 = vsub.s32 0, %v407
      %v409 = vsel %vm403, %v408, %v407
      %vm410 = vcmp.lt.s32.totalorder %v276, 0
      %v411 = vsub.s32 0, %v276
      %v412 = vsel %vm410, %v411, %v276
      %v413 = vshrl.u32 %v412, 4
      %v414 = vand.u32 %v412, 15
      %v415 = vsub.s32 0, %v414
      %v416 = vsel %vm410, %v415, %v414
      %vm417 = vcmp.lt.s32.totalorder %v277, 0
      %v418 = vsub.s32 0, %v277
      %v419 = vsel %vm417, %v418, %v277
      %v420 = vshrl.u32 %v419, 4
      %v421 = vand.u32 %v419, 15
      %v422 = vsub.s32 0, %v421
      %v423 = vsel %vm417, %v422, %v421
      %vm424 = vcmp.lt.s32.totalorder %v278, 0
      %v425 = vsub.s32 0, %v278
      %v426 = vsel %vm424, %v425, %v278
      %v427 = vshrl.u32 %v426, 4
      %v428 = vand.u32 %v426, 15
      %v429 = vsub.s32 0, %v428
      %v430 = vsel %vm424, %v429, %v428
      %vm431 = vcmp.lt.s32.totalorder %v279, 0
      %v432 = vsub.s32 0, %v279
      %v433 = vsel %vm431, %v432, %v279
      %v434 = vshrl.u32 %v433, 4
      %v435 = vand.u32 %v433, 15
      %v436 = vsub.s32 0, %v435
      %v437 = vsel %vm431, %v436, %v435
      %vm438 = vcmp.lt.s32.totalorder %v280, 0
      %v439 = vsub.s32 0, %v280
      %v440 = vsel %vm438, %v439, %v280
      %v441 = vshrl.u32 %v440, 4
      %v442 = vand.u32 %v440, 15
      %v443 = vsub.s32 0, %v442
      %v444 = vsel %vm438, %v443, %v442
      %vm445 = vcmp.lt.s32.totalorder %v281, 0
      %v446 = vsub.s32 0, %v281
      %v447 = vsel %vm445, %v446, %v281
      %v448 = vshrl.u32 %v447, 4
      %v449 = vand.u32 %v447, 15
      %v450 = vsub.s32 0, %v449
      %v451 = vsel %vm445, %v450, %v449
      %vm452 = vcmp.lt.s32.totalorder %v282, 0
      %v453 = vsub.s32 0, %v282
      %v454 = vsel %vm452, %v453, %v282
      %v455 = vshrl.u32 %v454, 4
      %v456 = vand.u32 %v454, 15
      %v457 = vsub.s32 0, %v456
      %v458 = vsel %vm452, %v457, %v456
      %vm459 = vcmp.lt.s32.totalorder %v283, 0
      %v460 = vsub.s32 0, %v283
      %v461 = vsel %vm459, %v460, %v283
      %v462 = vshrl.u32 %v461, 4
      %v463 = vand.u32 %v461, 15
      %v464 = vsub.s32 0, %v463
      %v465 = vsel %vm459, %v464, %v463
      %vm466 = vcmp.lt.s32.totalorder %v284, 0
      %v467 = vsub.s32 0, %v284
      %v468 = vsel %vm466, %v467, %v284
      %v469 = vshrl.u32 %v468, 4
      %v470 = vand.u32 %v468, 15
      %v471 = vsub.s32 0, %v470
      %v472 = vsel %vm466, %v471, %v470
      %vm473 = vcmp.lt.s32.totalorder %v285, 0
      %v474 = vsub.s32 0, %v285
      %v475 = vsel %vm473, %v474, %v285
      %v476 = vshrl.u32 %v475, 4
      %v477 = vand.u32 %v475, 15
      %v478 = vsub.s32 0, %v477
      %v479 = vsel %vm473, %v478, %v477
      %vm480 = vcmp.lt.s32.totalorder %v286, 0
      %v481 = vsub.s32 0, %v286
      %v482 = vsel %vm480, %v481, %v286
      %v483 = vshrl.u32 %v482, 4
      %v484 = vand.u32 %v482, 15
      %v485 = vsub.s32 0, %v484
      %v486 = vsel %vm480, %v485, %v484
      %vm487 = vcmp.lt.s32.totalorder %v287, 0
      %v488 = vsub.s32 0, %v287
      %v489 = vsel %vm487, %v488, %v287
      %v490 = vshrl.u32 %v489, 4
      %v491 = vand.u32 %v489, 15
      %v492 = vsub.s32 0, %v491
      %v493 = vsel %vm487, %v492, %v491
      %vm494 = vcmp.lt.s32.totalorder %v288, 0
      %v495 = vsub.s32 0, %v288
      %v496 = vsel %vm494, %v495, %v288
      %v497 = vshrl.u32 %v496, 4
      %v498 = vand.u32 %v496, 15
      %v499 = vsub.s32 0, %v498
      %v500 = vsel %vm494, %v499, %v498
      %vm501 = vcmp.lt.s32.totalorder %v289, 0
      %v502 = vsub.s32 0, %v289
      %v503 = vsel %vm501, %v502, %v289
      %v504 = vshrl.u32 %v503, 4
      %v505 = vand.u32 %v503, 15
      %v506 = vsub.s32 0, %v505
      %v507 = vsel %vm501, %v506, %v505
      %vm508 = vcmp.lt.s32.totalorder %v290, 0
      %v509 = vsub.s32 0, %v290
      %v510 = vsel %vm508, %v509, %v290
      %v511 = vshrl.u32 %v510, 4
      %v512 = vand.u32 %v510, 15
      %v513 = vsub.s32 0, %v512
      %v514 = vsel %vm508, %v513, %v512
      %vm515 = vcmp.lt.s32.totalorder %v297, 15
      %vm516 = vcmp.lt.s32.totalorder %v304, 15
      %vm517 = vcmp.lt.s32.totalorder %v311, 15
      %vm518 = vcmp.lt.s32.totalorder %v318, 15
      %vm519 = vcmp.lt.s32.totalorder %v325, 15
      %vm520 = vcmp.lt.s32.totalorder %v332, 15
      %vm521 = vcmp.lt.s32.totalorder %v339, 15
      %vm522 = vcmp.lt.s32.totalorder %v346, 15
      %vm523 = vcmp.lt.s32.totalorder %v353, 15
      %vm524 = vcmp.lt.s32.totalorder %v360, 15
      %vm525 = vcmp.lt.s32.totalorder %v367, 15
      %vm526 = vcmp.lt.s32.totalorder %v374, 15
      %vm527 = vcmp.lt.s32.totalorder %v381, 15
      %vm528 = vcmp.lt.s32.totalorder %v388, 15
      %vm529 = vcmp.lt.s32.totalorder %v395, 15
      %vm530 = vcmp.lt.s32.totalorder %v402, 15
      %vm531 = vcmp.lt.s32.totalorder %v409, 15
      %vm532 = vcmp.lt.s32.totalorder %v416, 15
      %vm533 = vcmp.lt.s32.totalorder %v423, 15
      %vm534 = vcmp.lt.s32.totalorder %v430, 15
      %vm535 = vcmp.lt.s32.totalorder %v437, 15
      %vm536 = vcmp.lt.s32.totalorder %v444, 15
      %vm537 = vcmp.lt.s32.totalorder %v451, 15
      %vm538 = vcmp.lt.s32.totalorder %v458, 15
      %vm539 = vcmp.lt.s32.totalorder %v465, 15
      %vm540 = vcmp.lt.s32.totalorder %v472, 15
      %vm541 = vcmp.lt.s32.totalorder %v479, 15
      %vm542 = vcmp.lt.s32.totalorder %v486, 15
      %vm543 = vcmp.lt.s32.totalorder %v493, 15
      %vm544 = vcmp.lt.s32.totalorder %v500, 15
      %vm545 = vcmp.lt.s32.totalorder %v507, 15
      %vm546 = vcmp.lt.s32.totalorder %v514, 15
      %v547 = vsel %vm515, 1, 0
      %v548 = vsel %vm516, 1, 0
      %v549 = vsel %vm517, 1, 0
      %v550 = vsel %vm518, 1, 0
      %v551 = vsel %vm519, 1, 0
      %v552 = vsel %vm520, 1, 0
      %v553 = vsel %vm521, 1, 0
      %v554 = vsel %vm522, 1, 0
      %v555 = vsel %vm523, 1, 0
      %v556 = vsel %vm524, 1, 0
      %v557 = vsel %vm525, 1, 0
      %v558 = vsel %vm526, 1, 0
      %v559 = vsel %vm527, 1, 0
      %v560 = vsel %vm528, 1, 0
      %v561 = vsel %vm529, 1, 0
      %v562 = vsel %vm530, 1, 0
      %v563 = vsel %vm531, 1, 0
      %v564 = vsel %vm532, 1, 0
      %v565 = vsel %vm533, 1, 0
      %v566 = vsel %vm534, 1, 0
      %v567 = vsel %vm535, 1, 0
      %v568 = vsel %vm536, 1, 0
      %v569 = vsel %vm537, 1, 0
      %v570 = vsel %vm538, 1, 0
      %v571 = vsel %vm539, 1, 0
      %v572 = vsel %vm540, 1, 0
      %v573 = vsel %vm541, 1, 0
      %v574 = vsel %vm542, 1, 0
      %v575 = vsel %vm543, 1, 0
      %v576 = vsel %vm544, 1, 0
      %v577 = vsel %vm545, 1, 0
      %v578 = vsel %vm546, 1, 0
      %v579 = vcvt.s32.f32 %v547
      %v580 = vcvt.s32.f32 %v548
      %v581 = vcvt.s32.f32 %v549
      %v582 = vcvt.s32.f32 %v550
      %v583 = vcvt.s32.f32 %v551
      %v584 = vcvt.s32.f32 %v552
      %v585 = vcvt.s32.f32 %v553
      %v586 = vcvt.s32.f32 %v554
      %v587 = vcvt.s32.f32 %v555
      %v588 = vcvt.s32.f32 %v556
      %v589 = vcvt.s32.f32 %v557
      %v590 = vcvt.s32.f32 %v558
      %v591 = vcvt.s32.f32 %v559
      %v592 = vcvt.s32.f32 %v560
      %v593 = vcvt.s32.f32 %v561
      %v594 = vcvt.s32.f32 %v562
      %v595 = vcvt.s32.f32 %v563
      %v596 = vcvt.s32.f32 %v564
      %v597 = vcvt.s32.f32 %v565
      %v598 = vcvt.s32.f32 %v566
      %v599 = vcvt.s32.f32 %v567
      %v600 = vcvt.s32.f32 %v568
      %v601 = vcvt.s32.f32 %v569
      %v602 = vcvt.s32.f32 %v570
      %v603 = vcvt.s32.f32 %v571
      %v604 = vcvt.s32.f32 %v572
      %v605 = vcvt.s32.f32 %v573
      %v606 = vcvt.s32.f32 %v574
      %v607 = vcvt.s32.f32 %v575
      %v608 = vcvt.s32.f32 %v576
      %v609 = vcvt.s32.f32 %v577
      %v610 = vcvt.s32.f32 %v578
      %vm611 = vcmp.gt.s32.totalorder %v297, 0
      %vm612 = vcmp.gt.s32.totalorder %v304, 0
      %vm613 = vcmp.gt.s32.totalorder %v311, 0
      %vm614 = vcmp.gt.s32.totalorder %v318, 0
      %vm615 = vcmp.gt.s32.totalorder %v325, 0
      %vm616 = vcmp.gt.s32.totalorder %v332, 0
      %vm617 = vcmp.gt.s32.totalorder %v339, 0
      %vm618 = vcmp.gt.s32.totalorder %v346, 0
      %vm619 = vcmp.gt.s32.totalorder %v353, 0
      %vm620 = vcmp.gt.s32.totalorder %v360, 0
      %vm621 = vcmp.gt.s32.totalorder %v367, 0
      %vm622 = vcmp.gt.s32.totalorder %v374, 0
      %vm623 = vcmp.gt.s32.totalorder %v381, 0
      %vm624 = vcmp.gt.s32.totalorder %v388, 0
      %vm625 = vcmp.gt.s32.totalorder %v395, 0
      %vm626 = vcmp.gt.s32.totalorder %v402, 0
      %vm627 = vcmp.gt.s32.totalorder %v409, 0
      %vm628 = vcmp.gt.s32.totalorder %v416, 0
      %vm629 = vcmp.gt.s32.totalorder %v423, 0
      %vm630 = vcmp.gt.s32.totalorder %v430, 0
      %vm631 = vcmp.gt.s32.totalorder %v437, 0
      %vm632 = vcmp.gt.s32.totalorder %v444, 0
      %vm633 = vcmp.gt.s32.totalorder %v451, 0
      %vm634 = vcmp.gt.s32.totalorder %v458, 0
      %vm635 = vcmp.gt.s32.totalorder %v465, 0
      %vm636 = vcmp.gt.s32.totalorder %v472, 0
      %vm637 = vcmp.gt.s32.totalorder %v479, 0
      %vm638 = vcmp.gt.s32.totalorder %v486, 0
      %vm639 = vcmp.gt.s32.totalorder %v493, 0
      %vm640 = vcmp.gt.s32.totalorder %v500, 0
      %vm641 = vcmp.gt.s32.totalorder %v507, 0
      %vm642 = vcmp.gt.s32.totalorder %v514, 0
      %v643 = vsel %vm611, 1, 0
      %v644 = vsel %vm612, 1, 0
      %v645 = vsel %vm613, 1, 0
      %v646 = vsel %vm614, 1, 0
      %v647 = vsel %vm615, 1, 0
      %v648 = vsel %vm616, 1, 0
      %v649 = vsel %vm617, 1, 0
      %v650 = vsel %vm618, 1, 0
      %v651 = vsel %vm619, 1, 0
      %v652 = vsel %vm620, 1, 0
      %v653 = vsel %vm621, 1, 0
      %v654 = vsel %vm622, 1, 0
      %v655 = vsel %vm623, 1, 0
      %v656 = vsel %vm624, 1, 0
      %v657 = vsel %vm625, 1, 0
      %v658 = vsel %vm626, 1, 0
      %v659 = vsel %vm627, 1, 0
      %v660 = vsel %vm628, 1, 0
      %v661 = vsel %vm629, 1, 0
      %v662 = vsel %vm630, 1, 0
      %v663 = vsel %vm631, 1, 0
      %v664 = vsel %vm632, 1, 0
      %v665 = vsel %vm633, 1, 0
      %v666 = vsel %vm634, 1, 0
      %v667 = vsel %vm635, 1, 0
      %v668 = vsel %vm636, 1, 0
      %v669 = vsel %vm637, 1, 0
      %v670 = vsel %vm638, 1, 0
      %v671 = vsel %vm639, 1, 0
      %v672 = vsel %vm640, 1, 0
      %v673 = vsel %vm641, 1, 0
      %v674 = vsel %vm642, 1, 0
      %v675 = vcvt.s32.f32 %v643
      %v676 = vcvt.s32.f32 %v644
      %v677 = vcvt.s32.f32 %v645
      %v678 = vcvt.s32.f32 %v646
      %v679 = vcvt.s32.f32 %v647
      %v680 = vcvt.s32.f32 %v648
      %v681 = vcvt.s32.f32 %v649
      %v682 = vcvt.s32.f32 %v650
      %v683 = vcvt.s32.f32 %v651
      %v684 = vcvt.s32.f32 %v652
      %v685 = vcvt.s32.f32 %v653
      %v686 = vcvt.s32.f32 %v654
      %v687 = vcvt.s32.f32 %v655
      %v688 = vcvt.s32.f32 %v656
      %v689 = vcvt.s32.f32 %v657
      %v690 = vcvt.s32.f32 %v658
      %v691 = vcvt.s32.f32 %v659
      %v692 = vcvt.s32.f32 %v660
      %v693 = vcvt.s32.f32 %v661
      %v694 = vcvt.s32.f32 %v662
      %v695 = vcvt.s32.f32 %v663
      %v696 = vcvt.s32.f32 %v664
      %v697 = vcvt.s32.f32 %v665
      %v698 = vcvt.s32.f32 %v666
      %v699 = vcvt.s32.f32 %v667
      %v700 = vcvt.s32.f32 %v668
      %v701 = vcvt.s32.f32 %v669
      %v702 = vcvt.s32.f32 %v670
      %v703 = vcvt.s32.f32 %v671
      %v704 = vcvt.s32.f32 %v672
      %v705 = vcvt.s32.f32 %v673
      %v706 = vcvt.s32.f32 %v674
      %v707 = vmul.f32 %v226, %v579
      %v708 = vmul.f32 %v227, %v580
      %v709 = vmul.f32 %v228, %v581
      %v710 = vmul.f32 %v229, %v582
      %v711 = vmul.f32 %v230, %v583
      %v712 = vmul.f32 %v231, %v584
      %v713 = vmul.f32 %v232, %v585
      %v714 = vmul.f32 %v233, %v586
      %v715 = vmul.f32 %v234, %v587
      %v716 = vmul.f32 %v235, %v588
      %v717 = vmul.f32 %v236, %v589
      %v718 = vmul.f32 %v237, %v590
      %v719 = vmul.f32 %v238, %v591
      %v720 = vmul.f32 %v239, %v592
      %v721 = vmul.f32 %v240, %v593
      %v722 = vmul.f32 %v241, %v594
      %v723 = vmul.f32 %v242, %v595
      %v724 = vmul.f32 %v243, %v596
      %v725 = vmul.f32 %v244, %v597
      %v726 = vmul.f32 %v245, %v598
      %v727 = vmul.f32 %v246, %v599
      %v728 = vmul.f32 %v247, %v600
      %v729 = vmul.f32 %v248, %v601
      %v730 = vmul.f32 %v249, %v602
      %v731 = vmul.f32 %v250, %v603
      %v732 = vmul.f32 %v251, %v604
      %v733 = vmul.f32 %v252, %v605
      %v734 = vmul.f32 %v253, %v606
      %v735 = vmul.f32 %v254, %v607
      %v736 = vmul.f32 %v255, %v608
      %v737 = vmul.f32 %v256, %v609
      %v738 = vmul.f32 %v257, %v610
      %v739 = vrot.slane %v707, 7
      %v740 = vrot.slane %v708, 7
      %v741 = vrot.slane %v709, 7
      %v742 = vrot.slane %v710, 7
      %v743 = vrot.slane %v711, 7
      %v744 = vrot.slane %v712, 7
      %v745 = vrot.slane %v713, 7
      %v746 = vrot.slane %v714, 7
      %v747 = vrot.slane %v715, 7
      %v748 = vrot.slane %v716, 7
      %v749 = vrot.slane %v717, 7
      %v750 = vrot.slane %v718, 7
      %v751 = vrot.slane %v719, 7
      %v752 = vrot.slane %v720, 7
      %v753 = vrot.slane %v721, 7
      %v754 = vrot.slane %v722, 7
      %v755 = vrot.slane %v723, 7
      %v756 = vrot.slane %v724, 7
      %v757 = vrot.slane %v725, 7
      %v758 = vrot.slane %v726, 7
      %v759 = vrot.slane %v727, 7
      %v760 = vrot.slane %v728, 7
      %v761 = vrot.slane %v729, 7
      %v762 = vrot.slane %v730, 7
      %v763 = vrot.slane %v731, 7
      %v764 = vrot.slane %v732, 7
      %v765 = vrot.slane %v733, 7
      %v766 = vrot.slane %v734, 7
      %v767 = vrot.slane %v735, 7
      %v768 = vrot.slane %v736, 7
      %v769 = vrot.slane %v737, 7
      %v770 = vrot.slane %v738, 7
      %vm771 = vcmp.lt.s32.totalorder %v259, 1
      %v772 = vsel %vm771, %v769, %v770
      %v773 = vsel %vm771, %v768, %v769
      %v774 = vsel %vm771, %v767, %v768
      %v775 = vsel %vm771, %v766, %v767
      %v776 = vsel %vm771, %v765, %v766
      %v777 = vsel %vm771, %v764, %v765
      %v778 = vsel %vm771, %v763, %v764
      %v779 = vsel %vm771, %v762, %v763
      %v780 = vsel %vm771, %v761, %v762
      %v781 = vsel %vm771, %v760, %v761
      %v782 = vsel %vm771, %v759, %v760
      %v783 = vsel %vm771, %v758, %v759
      %v784 = vsel %vm771, %v757, %v758
      %v785 = vsel %vm771, %v756, %v757
      %v786 = vsel %vm771, %v755, %v756
      %v787 = vsel %vm771, %v754, %v755
      %v788 = vsel %vm771, %v753, %v754
      %v789 = vsel %vm771, %v752, %v753
      %v790 = vsel %vm771, %v751, %v752
      %v791 = vsel %vm771, %v750, %v751
      %v792 = vsel %vm771, %v749, %v750
      %v793 = vsel %vm771, %v748, %v749
      %v794 = vsel %vm771, %v747, %v748
      %v795 = vsel %vm771, %v746, %v747
      %v796 = vsel %vm771, %v745, %v746
      %v797 = vsel %vm771, %v744, %v745
      %v798 = vsel %vm771, %v743, %v744
      %v799 = vsel %vm771, %v742, %v743
      %v800 = vsel %vm771, %v741, %v742
      %v801 = vsel %vm771, %v740, %v741
      %v802 = vsel %vm771, %v739, %v740
      %v803 = vsel %vm771, %v770, %v739
      %v804 = vmul.f32 %v226, %v675
      %v805 = vmul.f32 %v227, %v676
      %v806 = vmul.f32 %v228, %v677
      %v807 = vmul.f32 %v229, %v678
      %v808 = vmul.f32 %v230, %v679
      %v809 = vmul.f32 %v231, %v680
      %v810 = vmul.f32 %v232, %v681
      %v811 = vmul.f32 %v233, %v682
      %v812 = vmul.f32 %v234, %v683
      %v813 = vmul.f32 %v235, %v684
      %v814 = vmul.f32 %v236, %v685
      %v815 = vmul.f32 %v237, %v686
      %v816 = vmul.f32 %v238, %v687
      %v817 = vmul.f32 %v239, %v688
      %v818 = vmul.f32 %v240, %v689
      %v819 = vmul.f32 %v241, %v690
      %v820 = vmul.f32 %v242, %v691
      %v821 = vmul.f32 %v243, %v692
      %v822 = vmul.f32 %v244, %v693
      %v823 = vmul.f32 %v245, %v694
      %v824 = vmul.f32 %v246, %v695
      %v825 = vmul.f32 %v247, %v696
      %v826 = vmul.f32 %v248, %v697
      %v827 = vmul.f32 %v249, %v698
      %v828 = vmul.f32 %v250, %v699
      %v829 = vmul.f32 %v251, %v700
      %v830 = vmul.f32 %v252, %v701
      %v831 = vmul.f32 %v253, %v702
      %v832 = vmul.f32 %v254, %v703
      %v833 = vmul.f32 %v255, %v704
      %v834 = vmul.f32 %v256, %v705
      %v835 = vmul.f32 %v257, %v706
      %v836 = vrot.slane %v804, 1
      %v837 = vrot.slane %v805, 1
      %v838 = vrot.slane %v806, 1
      %v839 = vrot.slane %v807, 1
      %v840 = vrot.slane %v808, 1
      %v841 = vrot.slane %v809, 1
      %v842 = vrot.slane %v810, 1
      %v843 = vrot.slane %v811, 1
      %v844 = vrot.slane %v812, 1
      %v845 = vrot.slane %v813, 1
      %v846 = vrot.slane %v814, 1
      %v847 = vrot.slane %v815, 1
      %v848 = vrot.slane %v816, 1
      %v849 = vrot.slane %v817, 1
      %v850 = vrot.slane %v818, 1
      %v851 = vrot.slane %v819, 1
      %v852 = vrot.slane %v820, 1
      %v853 = vrot.slane %v821, 1
      %v854 = vrot.slane %v822, 1
      %v855 = vrot.slane %v823, 1
      %v856 = vrot.slane %v824, 1
      %v857 = vrot.slane %v825, 1
      %v858 = vrot.slane %v826, 1
      %v859 = vrot.slane %v827, 1
      %v860 = vrot.slane %v828, 1
      %v861 = vrot.slane %v829, 1
      %v862 = vrot.slane %v830, 1
      %v863 = vrot.slane %v831, 1
      %v864 = vrot.slane %v832, 1
      %v865 = vrot.slane %v833, 1
      %v866 = vrot.slane %v834, 1
      %v867 = vrot.slane %v835, 1
      %vm868 = vcmp.lt.s32.totalorder %v259, 7
      %v869 = vsel %vm868, %v866, %v867
      %v870 = vsel %vm868, %v865, %v866
      %v871 = vsel %vm868, %v864, %v865
      %v872 = vsel %vm868, %v863, %v864
      %v873 = vsel %vm868, %v862, %v863
      %v874 = vsel %vm868, %v861, %v862
      %v875 = vsel %vm868, %v860, %v861
      %v876 = vsel %vm868, %v859, %v860
      %v877 = vsel %vm868, %v858, %v859
      %v878 = vsel %vm868, %v857, %v858
      %v879 = vsel %vm868, %v856, %v857
      %v880 = vsel %vm868, %v855, %v856
      %v881 = vsel %vm868, %v854, %v855
      %v882 = vsel %vm868, %v853, %v854
      %v883 = vsel %vm868, %v852, %v853
      %v884 = vsel %vm868, %v851, %v852
      %v885 = vsel %vm868, %v850, %v851
      %v886 = vsel %vm868, %v849, %v850
      %v887 = vsel %vm868, %v848, %v849
      %v888 = vsel %vm868, %v847, %v848
      %v889 = vsel %vm868, %v846, %v847
      %v890 = vsel %vm868, %v845, %v846
      %v891 = vsel %vm868, %v844, %v845
      %v892 = vsel %vm868, %v843, %v844
      %v893 = vsel %vm868, %v842, %v843
      %v894 = vsel %vm868, %v841, %v842
      %v895 = vsel %vm868, %v840, %v841
      %v896 = vsel %vm868, %v839, %v840
      %v897 = vsel %vm868, %v838, %v839
      %v898 = vsel %vm868, %v837, %v838
      %v899 = vsel %vm868, %v836, %v837
      %v900 = vsel %vm868, %v867, %v836
      %v901 = vpack.c.bf16 %v802, %v803
      %v902 = vpack.c.bf16 %v800, %v801
      %v903 = vpack.c.bf16 %v798, %v799
      %v904 = vpack.c.bf16 %v796, %v797
      %v905 = vpack.c.bf16 %v794, %v795
      %v906 = vpack.c.bf16 %v792, %v793
      %v907 = vpack.c.bf16 %v790, %v791
      %v908 = vpack.c.bf16 %v788, %v789
      %v909 = vpack.c.bf16 %v786, %v787
      %v910 = vpack.c.bf16 %v784, %v785
      %v911 = vpack.c.bf16 %v782, %v783
      %v912 = vpack.c.bf16 %v780, %v781
      %v913 = vpack.c.bf16 %v778, %v779
      %v914 = vpack.c.bf16 %v776, %v777
      %v915 = vpack.c.bf16 %v774, %v775
      %v916 = vpack.c.bf16 %v772, %v773
      %v917 = vpack.c.bf16 %v227, %v226
      %v918 = vpack.c.bf16 %v229, %v228
      %v919 = vpack.c.bf16 %v231, %v230
      %v920 = vpack.c.bf16 %v233, %v232
      %v921 = vpack.c.bf16 %v235, %v234
      %v922 = vpack.c.bf16 %v237, %v236
      %v923 = vpack.c.bf16 %v239, %v238
      %v924 = vpack.c.bf16 %v241, %v240
      %v925 = vpack.c.bf16 %v243, %v242
      %v926 = vpack.c.bf16 %v245, %v244
      %v927 = vpack.c.bf16 %v247, %v246
      %v928 = vpack.c.bf16 %v249, %v248
      %v929 = vpack.c.bf16 %v251, %v250
      %v930 = vpack.c.bf16 %v253, %v252
      %v931 = vpack.c.bf16 %v255, %v254
      %v932 = vpack.c.bf16 %v257, %v256
      %v933 = vpack.c.bf16 %v898, %v899
      %v934 = vpack.c.bf16 %v896, %v897
      %v935 = vpack.c.bf16 %v894, %v895
      %v936 = vpack.c.bf16 %v892, %v893
      %v937 = vpack.c.bf16 %v890, %v891
      %v938 = vpack.c.bf16 %v888, %v889
      %v939 = vpack.c.bf16 %v886, %v887
      %v940 = vpack.c.bf16 %v884, %v885
      %v941 = vpack.c.bf16 %v882, %v883
      %v942 = vpack.c.bf16 %v880, %v881
      %v943 = vpack.c.bf16 %v878, %v879
      %v944 = vpack.c.bf16 %v876, %v877
      %v945 = vpack.c.bf16 %v874, %v875
      %v946 = vpack.c.bf16 %v872, %v873
      %v947 = vpack.c.bf16 %v870, %v871
      %v948 = vpack.c.bf16 %v900, %v869
      %s949 = scalar_lea.vmem %s1, 192
      %v950 = vld [vmem:[%s949] sm:$0xf]
      %v951 = vld [vmem:[%s949 + $0x4] sm:$0xf]
      %v952 = vld [vmem:[%s949 + $0x8] sm:$0xf]
      %v953 = vld [vmem:[%s949 + $0xc] sm:$0xf]
      %v954 = vld [vmem:[%s949 + $0x10] sm:$0xf]
      %v955 = vld [vmem:[%s949 + $0x14] sm:$0xf]
      %v956 = vld [vmem:[%s949 + $0x18] sm:$0xf]
      %v957 = vld [vmem:[%s949 + $0x1c] sm:$0xf]
      %v958 = vld [vmem:[%s949 + $0x20] sm:$0xf]
      %v959 = vld [vmem:[%s949 + $0x24] sm:$0xf]
      %v960 = vld [vmem:[%s949 + $0x28] sm:$0xf]
      %v961 = vld [vmem:[%s949 + $0x2c] sm:$0xf]
      %v962 = vld [vmem:[%s949 + $0x30] sm:$0xf]
      %v963 = vld [vmem:[%s949 + $0x34] sm:$0xf]
      %v964 = vld [vmem:[%s949 + $0x38] sm:$0xf]
      %v965 = vld [vmem:[%s949 + $0x3c] sm:$0xf]
      %v966 = vld [vmem:[%s949 + $0x40] sm:$0xf]
      %v967 = vld [vmem:[%s949 + $0x44] sm:$0xf]
      %v968 = vld [vmem:[%s949 + $0x48] sm:$0xf]
      %v969 = vld [vmem:[%s949 + $0x4c] sm:$0xf]
      %v970 = vld [vmem:[%s949 + $0x50] sm:$0xf]
      %v971 = vld [vmem:[%s949 + $0x54] sm:$0xf]
      %v972 = vld [vmem:[%s949 + $0x58] sm:$0xf]
      %v973 = vld [vmem:[%s949 + $0x5c] sm:$0xf]
      %v974 = vld [vmem:[%s949 + $0x60] sm:$0xf]
      %v975 = vld [vmem:[%s949 + $0x64] sm:$0xf]
      %v976 = vld [vmem:[%s949 + $0x68] sm:$0xf]
      %v977 = vld [vmem:[%s949 + $0x6c] sm:$0xf]
      %v978 = vld [vmem:[%s949 + $0x70] sm:$0xf]
      %v979 = vld [vmem:[%s949 + $0x74] sm:$0xf]
      %v980 = vld [vmem:[%s949 + $0x78] sm:$0xf]
      %v981 = vld [vmem:[%s949 + $0x7c] sm:$0xf]
      %v982 = vld [vmem:[%s949 + $0x80] sm:$0xf]
      %v983 = vld [vmem:[%s949 + $0x84] sm:$0xf]
      %v984 = vld [vmem:[%s949 + $0x88] sm:$0xf]
      %v985 = vld [vmem:[%s949 + $0x8c] sm:$0xf]
      %v986 = vld [vmem:[%s949 + $0x90] sm:$0xf]
      %v987 = vld [vmem:[%s949 + $0x94] sm:$0xf]
      %v988 = vld [vmem:[%s949 + $0x98] sm:$0xf]
      %v989 = vld [vmem:[%s949 + $0x9c] sm:$0xf]
      %v990 = vld [vmem:[%s949 + $0xa0] sm:$0xf]
      %v991 = vld [vmem:[%s949 + $0xa4] sm:$0xf]
      %v992 = vld [vmem:[%s949 + $0xa8] sm:$0xf]
      %v993 = vld [vmem:[%s949 + $0xac] sm:$0xf]
      %v994 = vld [vmem:[%s949 + $0xb0] sm:$0xf]
      %v995 = vld [vmem:[%s949 + $0xb4] sm:$0xf]
      %v996 = vld [vmem:[%s949 + $0xb8] sm:$0xf]
      %v997 = vld [vmem:[%s949 + $0xbc] sm:$0xf]
      %v998 = vld [vmem:[%s1] sm:$0xf]
      %v999 = vld [vmem:[%s1 + $0x4] sm:$0xf]
      %v1000 = vld [vmem:[%s1 + $0x8] sm:$0xf]
      %v1001 = vld [vmem:[%s1 + $0xc] sm:$0xf]
      %v1002 = vld [vmem:[%s1 + $0x10] sm:$0xf]
      %v1003 = vld [vmem:[%s1 + $0x14] sm:$0xf]
      %v1004 = vld [vmem:[%s1 + $0x18] sm:$0xf]
      %v1005 = vld [vmem:[%s1 + $0x1c] sm:$0xf]
      %v1006 = vld [vmem:[%s1 + $0x20] sm:$0xf]
      %v1007 = vld [vmem:[%s1 + $0x24] sm:$0xf]
      %v1008 = vld [vmem:[%s1 + $0x28] sm:$0xf]
      %v1009 = vld [vmem:[%s1 + $0x2c] sm:$0xf]
      %v1010 = vld [vmem:[%s1 + $0x30] sm:$0xf]
      %v1011 = vld [vmem:[%s1 + $0x34] sm:$0xf]
      %v1012 = vld [vmem:[%s1 + $0x38] sm:$0xf]
      %v1013 = vld [vmem:[%s1 + $0x3c] sm:$0xf]
      %v1014 = vld [vmem:[%s1 + $0x40] sm:$0xf]
      %v1015 = vld [vmem:[%s1 + $0x44] sm:$0xf]
      %v1016 = vld [vmem:[%s1 + $0x48] sm:$0xf]
      %v1017 = vld [vmem:[%s1 + $0x4c] sm:$0xf]
      %v1018 = vld [vmem:[%s1 + $0x50] sm:$0xf]
      %v1019 = vld [vmem:[%s1 + $0x54] sm:$0xf]
      %v1020 = vld [vmem:[%s1 + $0x58] sm:$0xf]
      %v1021 = vld [vmem:[%s1 + $0x5c] sm:$0xf]
      %v1022 = vld [vmem:[%s1 + $0x60] sm:$0xf]
      %v1023 = vld [vmem:[%s1 + $0x64] sm:$0xf]
      %v1024 = vld [vmem:[%s1 + $0x68] sm:$0xf]
      %v1025 = vld [vmem:[%s1 + $0x6c] sm:$0xf]
      %v1026 = vld [vmem:[%s1 + $0x70] sm:$0xf]
      %v1027 = vld [vmem:[%s1 + $0x74] sm:$0xf]
      %v1028 = vld [vmem:[%s1 + $0x78] sm:$0xf]
      %v1029 = vld [vmem:[%s1 + $0x7c] sm:$0xf]
      %v1030 = vld [vmem:[%s1 + $0x80] sm:$0xf]
      %v1031 = vld [vmem:[%s1 + $0x84] sm:$0xf]
      %v1032 = vld [vmem:[%s1 + $0x88] sm:$0xf]
      %v1033 = vld [vmem:[%s1 + $0x8c] sm:$0xf]
      %v1034 = vld [vmem:[%s1 + $0x90] sm:$0xf]
      %v1035 = vld [vmem:[%s1 + $0x94] sm:$0xf]
      %v1036 = vld [vmem:[%s1 + $0x98] sm:$0xf]
      %v1037 = vld [vmem:[%s1 + $0x9c] sm:$0xf]
      %v1038 = vld [vmem:[%s1 + $0xa0] sm:$0xf]
      %v1039 = vld [vmem:[%s1 + $0xa4] sm:$0xf]
      %v1040 = vld [vmem:[%s1 + $0xa8] sm:$0xf]
      %v1041 = vld [vmem:[%s1 + $0xac] sm:$0xf]
      %v1042 = vld [vmem:[%s1 + $0xb0] sm:$0xf]
      %v1043 = vld [vmem:[%s1 + $0xb4] sm:$0xf]
      %v1044 = vld [vmem:[%s1 + $0xb8] sm:$0xf]
      %v1045 = vld [vmem:[%s1 + $0xbc] sm:$0xf]
      %v1094 = vunpack.c.l.b16 %v998
      %v1095 = vunpack.c.l.b16 %v999
      %v1096 = vunpack.c.l.b16 %v1000
      %v1097 = vunpack.c.l.b16 %v1001
      %v1098 = vunpack.c.l.b16 %v1002
      %v1099 = vunpack.c.l.b16 %v1003
      %v1100 = vunpack.c.l.b16 %v1004
      %v1101 = vunpack.c.l.b16 %v1005
      %v1102 = vunpack.c.l.b16 %v1006
      %v1103 = vunpack.c.l.b16 %v1007
      %v1104 = vunpack.c.l.b16 %v1008
      %v1105 = vunpack.c.l.b16 %v1009
      %v1106 = vunpack.c.l.b16 %v1010
      %v1107 = vunpack.c.l.b16 %v1011
      %v1108 = vunpack.c.l.b16 %v1012
      %v1109 = vunpack.c.l.b16 %v1013
      %v1110 = vunpack.c.l.b16 %v1014
      %v1111 = vunpack.c.l.b16 %v1015
      %v1112 = vunpack.c.l.b16 %v1016
      %v1113 = vunpack.c.l.b16 %v1017
      %v1114 = vunpack.c.l.b16 %v1018
      %v1115 = vunpack.c.l.b16 %v1019
      %v1116 = vunpack.c.l.b16 %v1020
      %v1117 = vunpack.c.l.b16 %v1021
      %v1118 = vunpack.c.l.b16 %v1022
      %v1119 = vunpack.c.l.b16 %v1023
      %v1120 = vunpack.c.l.b16 %v1024
      %v1121 = vunpack.c.l.b16 %v1025
      %v1122 = vunpack.c.l.b16 %v1026
      %v1123 = vunpack.c.l.b16 %v1027
      %v1124 = vunpack.c.l.b16 %v1028
      %v1125 = vunpack.c.l.b16 %v1029
      %v1126 = vunpack.c.l.b16 %v1030
      %v1127 = vunpack.c.l.b16 %v1031
      %v1128 = vunpack.c.l.b16 %v1032
      %v1129 = vunpack.c.l.b16 %v1033
      %v1130 = vunpack.c.l.b16 %v1034
      %v1131 = vunpack.c.l.b16 %v1035
      %v1132 = vunpack.c.l.b16 %v1036
      %v1133 = vunpack.c.l.b16 %v1037
      %v1134 = vunpack.c.l.b16 %v1038
      %v1135 = vunpack.c.l.b16 %v1039
      %v1136 = vunpack.c.l.b16 %v1040
      %v1137 = vunpack.c.l.b16 %v1041
      %v1138 = vunpack.c.l.b16 %v1042
      %v1139 = vunpack.c.l.b16 %v1043
      %v1140 = vunpack.c.l.b16 %v1044
      %v1141 = vunpack.c.l.b16 %v1045
      %v1142 = vpack.c.b16 %v1095, %v1094
      %v1143 = vpack.c.b16 %v1097, %v1096
      %v1144 = vpack.c.b16 %v1099, %v1098
      %v1145 = vpack.c.b16 %v1101, %v1100
      %v1146 = vpack.c.b16 %v1103, %v1102
      %v1147 = vpack.c.b16 %v1105, %v1104
      %v1148 = vpack.c.b16 %v1107, %v1106
      %v1149 = vpack.c.b16 %v1109, %v1108
      %v1150 = vpack.c.b16 %v1111, %v1110
      %v1151 = vpack.c.b16 %v1113, %v1112
      %v1152 = vpack.c.b16 %v1115, %v1114
      %v1153 = vpack.c.b16 %v1117, %v1116
      %v1154 = vpack.c.b16 %v1119, %v1118
      %v1155 = vpack.c.b16 %v1121, %v1120
      %v1156 = vpack.c.b16 %v1123, %v1122
      %v1157 = vpack.c.b16 %v1125, %v1124
      %v1158 = vpack.c.b16 %v1127, %v1126
      %v1159 = vpack.c.b16 %v1129, %v1128
      %v1160 = vpack.c.b16 %v1131, %v1130
      %v1161 = vpack.c.b16 %v1133, %v1132
      %v1162 = vpack.c.b16 %v1135, %v1134
      %v1163 = vpack.c.b16 %v1137, %v1136
      %v1164 = vpack.c.b16 %v1139, %v1138
      %v1165 = vpack.c.b16 %v1141, %v1140
      %1190 = vmatprep.subr.bf16.mxu0 0
      %1191 = vmatpush1.bf16.msra.mxu0 %v1149
      %1192 = vmatprep.subr.bf16.mxu0 0
      %1193 = vmatpush1.bf16.msra.mxu0 %v1148
      %1194 = vmatprep.subr.bf16.mxu0 0
      %1195 = vmatpush1.bf16.msra.mxu0 %v1147
      %1196 = vmatprep.subr.bf16.mxu0 0
      %1197 = vmatpush1.bf16.msra.mxu0 %v1146
      %1198 = vmatprep.subr.bf16.mxu0 0
      %1199 = vmatpush1.bf16.msra.mxu0 %v1145
      %1200 = vmatprep.subr.bf16.mxu0 0
      %1201 = vmatpush1.bf16.msra.mxu0 %v1144
      %1202 = vmatprep.subr.bf16.mxu0 0
      %1203 = vmatpush1.bf16.msra.mxu0 %v1143
      %1204 = vmatprep.subr.bf16.mxu0 0
      %1205 = vmatpush1.bf16.msra.mxu0 %v1142
      %1206 = vmatprep.subr.bf16.mxu0 0
      %1207 = vmatpush2.bf16.msra.mxu0 %v1157
      %1208 = vmatprep.subr.bf16.mxu0 0
      %1209 = vmatpush2.bf16.msra.mxu0 %v1156
      %1210 = vmatprep.subr.bf16.mxu0 0
      %1211 = vmatpush2.bf16.msra.mxu0 %v1155
      %1212 = vmatprep.subr.bf16.mxu0 0
      %1213 = vmatpush2.bf16.msra.mxu0 %v1154
      %1214 = vmatprep.subr.bf16.mxu0 0
      %1215 = vmatpush2.bf16.msra.mxu0 %v1153
      %1216 = vmatprep.subr.bf16.mxu0 0
      %1217 = vmatpush2.bf16.msra.mxu0 %v1152
      %1218 = vmatprep.subr.bf16.mxu0 0
      %1219 = vmatpush2.bf16.msra.mxu0 %v1151
      %1220 = vmatprep.subr.bf16.mxu0 0
      %1221 = vmatpush2.bf16.msra.mxu0 %v1150
      %1222 = vmatprep.mubr.bf16.mxu0 %v917
      %1223 = vmatmul.mubr.bf16.gmra.mxu0 %v901
      %v1224 = vpop.f32.mrf.mxu0
      %v1225 = vadd.f32 0.0, %v1224
      %v1226 = vpop.f32.mrf.mxu0
      %v1227 = vpop.f32.mrf.mxu0
      %v1228 = vadd.f32 0.0, %v1227
      %v1229 = vpop.f32.mrf.mxu0
      %1230 = vmatprep.mubr.bf16.mxu0 %v918
      %1231 = vmatmul.mubr.bf16.gmra.mxu0 %v902
      %v1232 = vpop.f32.mrf.mxu0
      %v1233 = vadd.f32 0.0, %v1232
      %v1234 = vpop.f32.mrf.mxu0
      %v1235 = vpop.f32.mrf.mxu0
      %v1236 = vadd.f32 0.0, %v1235
      %v1237 = vpop.f32.mrf.mxu0
      %1238 = vmatprep.mubr.bf16.mxu0 %v919
      %1239 = vmatmul.mubr.bf16.gmra.mxu0 %v903
      %v1240 = vpop.f32.mrf.mxu0
      %v1241 = vadd.f32 0.0, %v1240
      %v1242 = vpop.f32.mrf.mxu0
      %v1243 = vpop.f32.mrf.mxu0
      %v1244 = vadd.f32 0.0, %v1243
      %v1245 = vpop.f32.mrf.mxu0
      %1246 = vmatprep.mubr.bf16.mxu0 %v920
      %1247 = vmatmul.mubr.bf16.gmra.mxu0 %v904
      %v1248 = vpop.f32.mrf.mxu0
      %v1249 = vadd.f32 0.0, %v1248
      %v1250 = vpop.f32.mrf.mxu0
      %v1251 = vpop.f32.mrf.mxu0
      %v1252 = vadd.f32 0.0, %v1251
      %v1253 = vpop.f32.mrf.mxu0
      %1254 = vmatprep.mubr.bf16.mxu0 %v921
      %1255 = vmatmul.mubr.bf16.gmra.mxu0 %v905
      %v1256 = vpop.f32.mrf.mxu0
      %v1257 = vadd.f32 0.0, %v1256
      %v1258 = vpop.f32.mrf.mxu0
      %v1259 = vpop.f32.mrf.mxu0
      %v1260 = vadd.f32 0.0, %v1259
      %v1261 = vpop.f32.mrf.mxu0
      %1262 = vmatprep.mubr.bf16.mxu0 %v922
      %1263 = vmatmul.mubr.bf16.gmra.mxu0 %v906
      %v1264 = vpop.f32.mrf.mxu0
      %v1265 = vadd.f32 0.0, %v1264
      %v1266 = vpop.f32.mrf.mxu0
      %v1267 = vpop.f32.mrf.mxu0
      %v1268 = vadd.f32 0.0, %v1267
      %v1269 = vpop.f32.mrf.mxu0
      %1270 = vmatprep.mubr.bf16.mxu0 %v923
      %1271 = vmatmul.mubr.bf16.gmra.mxu0 %v907
      %v1272 = vpop.f32.mrf.mxu0
      %v1273 = vadd.f32 0.0, %v1272
      %v1274 = vpop.f32.mrf.mxu0
      %v1275 = vpop.f32.mrf.mxu0
      %v1276 = vadd.f32 0.0, %v1275
      %v1277 = vpop.f32.mrf.mxu0
      %1278 = vmatprep.mubr.bf16.mxu0 %v924
      %1279 = vmatmul.mubr.bf16.gmra.mxu0 %v908
      %v1280 = vpop.f32.mrf.mxu0
      %v1281 = vadd.f32 0.0, %v1280
      %v1282 = vpop.f32.mrf.mxu0
      %v1283 = vpop.f32.mrf.mxu0
      %v1284 = vadd.f32 0.0, %v1283
      %v1285 = vpop.f32.mrf.mxu0
      %1286 = vmatprep.mubr.bf16.mxu0 %v925
      %1287 = vmatmul.mubr.bf16.gmra.mxu0 %v909
      %v1288 = vpop.f32.mrf.mxu0
      %v1289 = vadd.f32 0.0, %v1288
      %v1290 = vpop.f32.mrf.mxu0
      %v1291 = vpop.f32.mrf.mxu0
      %v1292 = vadd.f32 0.0, %v1291
      %v1293 = vpop.f32.mrf.mxu0
      %1294 = vmatprep.mubr.bf16.mxu0 %v926
      %1295 = vmatmul.mubr.bf16.gmra.mxu0 %v910
      %v1296 = vpop.f32.mrf.mxu0
      %v1297 = vadd.f32 0.0, %v1296
      %v1298 = vpop.f32.mrf.mxu0
      %v1299 = vpop.f32.mrf.mxu0
      %v1300 = vadd.f32 0.0, %v1299
      %v1301 = vpop.f32.mrf.mxu0
      %1302 = vmatprep.mubr.bf16.mxu0 %v927
      %1303 = vmatmul.mubr.bf16.gmra.mxu0 %v911
      %v1304 = vpop.f32.mrf.mxu0
      %v1305 = vadd.f32 0.0, %v1304
      %v1306 = vpop.f32.mrf.mxu0
      %v1307 = vpop.f32.mrf.mxu0
      %v1308 = vadd.f32 0.0, %v1307
      %v1309 = vpop.f32.mrf.mxu0
      %1310 = vmatprep.mubr.bf16.mxu0 %v928
      %1311 = vmatmul.mubr.bf16.gmra.mxu0 %v912
      %v1312 = vpop.f32.mrf.mxu0
      %v1313 = vadd.f32 0.0, %v1312
      %v1314 = vpop.f32.mrf.mxu0
      %v1315 = vpop.f32.mrf.mxu0
      %v1316 = vadd.f32 0.0, %v1315
      %v1317 = vpop.f32.mrf.mxu0
      %1318 = vmatprep.mubr.bf16.mxu0 %v929
      %1319 = vmatmul.mubr.bf16.gmra.mxu0 %v913
      %v1320 = vpop.f32.mrf.mxu0
      %v1321 = vadd.f32 0.0, %v1320
      %v1322 = vpop.f32.mrf.mxu0
      %v1323 = vpop.f32.mrf.mxu0
      %v1324 = vadd.f32 0.0, %v1323
      %v1325 = vpop.f32.mrf.mxu0
      %1326 = vmatprep.mubr.bf16.mxu0 %v930
      %1327 = vmatmul.mubr.bf16.gmra.mxu0 %v914
      %v1328 = vpop.f32.mrf.mxu0
      %v1329 = vadd.f32 0.0, %v1328
      %v1330 = vpop.f32.mrf.mxu0
      %v1331 = vpop.f32.mrf.mxu0
      %v1332 = vadd.f32 0.0, %v1331
      %v1333 = vpop.f32.mrf.mxu0
      %1334 = vmatprep.mubr.bf16.mxu0 %v931
      %1335 = vmatmul.mubr.bf16.gmra.mxu0 %v915
      %v1336 = vpop.f32.mrf.mxu0
      %v1337 = vadd.f32 0.0, %v1336
      %v1338 = vpop.f32.mrf.mxu0
      %v1339 = vpop.f32.mrf.mxu0
      %v1340 = vadd.f32 0.0, %v1339
      %v1341 = vpop.f32.mrf.mxu0
      %1342 = vmatprep.mubr.bf16.mxu0 %v932
      %1343 = vmatmul.mubr.bf16.gmra.mxu0 %v916
      %v1344 = vpop.f32.mrf.mxu0
      %v1345 = vpop.f32.mrf.mxu0
      %v1346 = vpop.f32.mrf.mxu0
      %v1347 = vpop.f32.mrf.mxu0
      %1348 = vdwg.mxu0
      %1349 = vmatprep.subr.bf16.mxu0 0
      %1350 = vmatpush1.bf16.msra.mxu0 %v1165
      %1351 = vmatprep.subr.bf16.mxu0 0
      %1352 = vmatpush1.bf16.msra.mxu0 %v1164
      %1353 = vmatprep.subr.bf16.mxu0 0
      %1354 = vmatpush1.bf16.msra.mxu0 %v1163
      %1355 = vmatprep.subr.bf16.mxu0 0
      %1356 = vmatpush1.bf16.msra.mxu0 %v1162
      %1357 = vmatprep.subr.bf16.mxu0 0
      %1358 = vmatpush1.bf16.msra.mxu0 %v1161
      %1359 = vmatprep.subr.bf16.mxu0 0
      %1360 = vmatpush1.bf16.msra.mxu0 %v1160
      %1361 = vmatprep.subr.bf16.mxu0 0
      %1362 = vmatpush1.bf16.msra.mxu0 %v1159
      %1363 = vmatprep.subr.bf16.mxu0 0
      %1364 = vmatpush1.bf16.msra.mxu0 %v1158
      %1365 = vmatprep.subr.bf16.mxu0 0
      %1366 = vmatpush2.bf16.msra.mxu0 0
      %1367 = vmatprep.subr.bf16.mxu0 0
      %1368 = vmatpush2.bf16.msra.mxu0 0
      %1369 = vmatprep.subr.bf16.mxu0 0
      %1370 = vmatpush2.bf16.msra.mxu0 0
      %1371 = vmatprep.subr.bf16.mxu0 0
      %1372 = vmatpush2.bf16.msra.mxu0 0
      %1373 = vmatprep.subr.bf16.mxu0 0
      %1374 = vmatpush2.bf16.msra.mxu0 0
      %1375 = vmatprep.subr.bf16.mxu0 0
      %1376 = vmatpush2.bf16.msra.mxu0 0
      %1377 = vmatprep.subr.bf16.mxu0 0
      %1378 = vmatpush2.bf16.msra.mxu0 0
      %1379 = vmatprep.subr.bf16.mxu0 0
      %1380 = vmatpush2.bf16.msra.mxu0 0
      %1381 = vmatprep.mubr.bf16.mxu0 0
      %1382 = vmatmul.mubr.bf16.gmra.mxu0 %v933
      %v1383 = vpop.f32.mrf.mxu0
      %v1384 = vadd.f32 %v1225, %v1383
      %v1385 = vpop.f32.mrf.mxu0
      %v1386 = vpop.f32.mrf.mxu0
      %v1387 = vadd.f32 %v1228, %v1386
      %v1388 = vpop.f32.mrf.mxu0
      %1389 = vmatprep.mubr.bf16.mxu0 0
      %1390 = vmatmul.mubr.bf16.gmra.mxu0 %v934
      %v1391 = vpop.f32.mrf.mxu0
      %v1392 = vadd.f32 %v1233, %v1391
      %v1393 = vpop.f32.mrf.mxu0
      %v1394 = vpop.f32.mrf.mxu0
      %v1395 = vadd.f32 %v1236, %v1394
      %v1396 = vpop.f32.mrf.mxu0
      %1397 = vmatprep.mubr.bf16.mxu0 0
      %1398 = vmatmul.mubr.bf16.gmra.mxu0 %v935
      %v1399 = vpop.f32.mrf.mxu0
      %v1400 = vadd.f32 %v1241, %v1399
      %v1401 = vpop.f32.mrf.mxu0
      %v1402 = vpop.f32.mrf.mxu0
      %v1403 = vadd.f32 %v1244, %v1402
      %v1404 = vpop.f32.mrf.mxu0
      %1405 = vmatprep.mubr.bf16.mxu0 0
      %1406 = vmatmul.mubr.bf16.gmra.mxu0 %v936
      %v1407 = vpop.f32.mrf.mxu0
      %v1408 = vadd.f32 %v1249, %v1407
      %v1409 = vpop.f32.mrf.mxu0
      %v1410 = vpop.f32.mrf.mxu0
      %v1411 = vadd.f32 %v1252, %v1410
      %v1412 = vpop.f32.mrf.mxu0
      %1413 = vmatprep.mubr.bf16.mxu0 0
      %1414 = vmatmul.mubr.bf16.gmra.mxu0 %v937
      %v1415 = vpop.f32.mrf.mxu0
      %v1416 = vadd.f32 %v1257, %v1415
      %v1417 = vpop.f32.mrf.mxu0
      %v1418 = vpop.f32.mrf.mxu0
      %v1419 = vadd.f32 %v1260, %v1418
      %v1420 = vpop.f32.mrf.mxu0
      %1421 = vmatprep.mubr.bf16.mxu0 0
      %1422 = vmatmul.mubr.bf16.gmra.mxu0 %v938
      %v1423 = vpop.f32.mrf.mxu0
      %v1424 = vadd.f32 %v1265, %v1423
      %v1425 = vpop.f32.mrf.mxu0
      %v1426 = vpop.f32.mrf.mxu0
      %v1427 = vadd.f32 %v1268, %v1426
      %v1428 = vpop.f32.mrf.mxu0
      %1429 = vmatprep.mubr.bf16.mxu0 0
      %1430 = vmatmul.mubr.bf16.gmra.mxu0 %v939
      %v1431 = vpop.f32.mrf.mxu0
      %v1432 = vadd.f32 %v1273, %v1431
      %v1433 = vpop.f32.mrf.mxu0
      %v1434 = vpop.f32.mrf.mxu0
      %v1435 = vadd.f32 %v1276, %v1434
      %v1436 = vpop.f32.mrf.mxu0
      %1437 = vmatprep.mubr.bf16.mxu0 0
      %1438 = vmatmul.mubr.bf16.gmra.mxu0 %v940
      %v1439 = vpop.f32.mrf.mxu0
      %v1440 = vadd.f32 %v1281, %v1439
      %v1441 = vpop.f32.mrf.mxu0
      %v1442 = vpop.f32.mrf.mxu0
      %v1443 = vadd.f32 %v1284, %v1442
      %v1444 = vpop.f32.mrf.mxu0
      %1445 = vmatprep.mubr.bf16.mxu0 0
      %1446 = vmatmul.mubr.bf16.gmra.mxu0 %v941
      %v1447 = vpop.f32.mrf.mxu0
      %v1448 = vadd.f32 %v1289, %v1447
      %v1449 = vpop.f32.mrf.mxu0
      %v1450 = vpop.f32.mrf.mxu0
      %v1451 = vadd.f32 %v1292, %v1450
      %v1452 = vpop.f32.mrf.mxu0
      %1453 = vmatprep.mubr.bf16.mxu0 0
      %1454 = vmatmul.mubr.bf16.gmra.mxu0 %v942
      %v1455 = vpop.f32.mrf.mxu0
      %v1456 = vadd.f32 %v1297, %v1455
      %v1457 = vpop.f32.mrf.mxu0
      %v1458 = vpop.f32.mrf.mxu0
      %v1459 = vadd.f32 %v1300, %v1458
      %v1460 = vpop.f32.mrf.mxu0
      %1461 = vmatprep.mubr.bf16.mxu0 0
      %1462 = vmatmul.mubr.bf16.gmra.mxu0 %v943
      %v1463 = vpop.f32.mrf.mxu0
      %v1464 = vadd.f32 %v1305, %v1463
      %v1465 = vpop.f32.mrf.mxu0
      %v1466 = vpop.f32.mrf.mxu0
      %v1467 = vadd.f32 %v1308, %v1466
      %v1468 = vpop.f32.mrf.mxu0
      %1469 = vmatprep.mubr.bf16.mxu0 0
      %1470 = vmatmul.mubr.bf16.gmra.mxu0 %v944
      %v1471 = vpop.f32.mrf.mxu0
      %v1472 = vadd.f32 %v1313, %v1471
      %v1473 = vpop.f32.mrf.mxu0
      %v1474 = vpop.f32.mrf.mxu0
      %v1475 = vadd.f32 %v1316, %v1474
      %v1476 = vpop.f32.mrf.mxu0
      %1477 = vmatprep.mubr.bf16.mxu0 0
      %1478 = vmatmul.mubr.bf16.gmra.mxu0 %v945
      %v1479 = vpop.f32.mrf.mxu0
      %v1480 = vadd.f32 %v1321, %v1479
      %v1481 = vpop.f32.mrf.mxu0
      %v1482 = vpop.f32.mrf.mxu0
      %v1483 = vadd.f32 %v1324, %v1482
      %v1484 = vpop.f32.mrf.mxu0
      %1485 = vmatprep.mubr.bf16.mxu0 0
      %1486 = vmatmul.mubr.bf16.gmra.mxu0 %v946
      %v1487 = vpop.f32.mrf.mxu0
      %v1488 = vadd.f32 %v1329, %v1487
      %v1489 = vpop.f32.mrf.mxu0
      %v1490 = vpop.f32.mrf.mxu0
      %v1491 = vadd.f32 %v1332, %v1490
      %v1492 = vpop.f32.mrf.mxu0
      %1493 = vmatprep.mubr.bf16.mxu0 0
      %1494 = vmatmul.mubr.bf16.gmra.mxu0 %v947
      %v1495 = vpop.f32.mrf.mxu0
      %v1496 = vadd.f32 %v1337, %v1495
      %v1497 = vpop.f32.mrf.mxu0
      %v1498 = vpop.f32.mrf.mxu0
      %v1499 = vadd.f32 %v1340, %v1498
      %v1500 = vpop.f32.mrf.mxu0
      %1501 = vmatprep.mubr.bf16.mxu0 0
      %1502 = vmatmul.mubr.bf16.gmra.mxu0 %v948
      %v1503 = vpop.f32.mrf.mxu0
      %v1504 = vpop.f32.mrf.mxu0
      %v1505 = vpop.f32.mrf.mxu0
      %v1506 = vpop.f32.mrf.mxu0
      %1507 = vdwg.mxu0
      %v1556 = vunpack.c.l.b16 %v950
      %v1557 = vunpack.c.l.b16 %v951
      %v1558 = vunpack.c.l.b16 %v952
      %v1559 = vunpack.c.l.b16 %v953
      %v1560 = vunpack.c.l.b16 %v954
      %v1561 = vunpack.c.l.b16 %v955
      %v1562 = vunpack.c.l.b16 %v956
      %v1563 = vunpack.c.l.b16 %v957
      %v1564 = vunpack.c.l.b16 %v958
      %v1565 = vunpack.c.l.b16 %v959
      %v1566 = vunpack.c.l.b16 %v960
      %v1567 = vunpack.c.l.b16 %v961
      %v1568 = vunpack.c.l.b16 %v962
      %v1569 = vunpack.c.l.b16 %v963
      %v1570 = vunpack.c.l.b16 %v964
      %v1571 = vunpack.c.l.b16 %v965
      %v1572 = vunpack.c.l.b16 %v966
      %v1573 = vunpack.c.l.b16 %v967
      %v1574 = vunpack.c.l.b16 %v968
      %v1575 = vunpack.c.l.b16 %v969
      %v1576 = vunpack.c.l.b16 %v970
      %v1577 = vunpack.c.l.b16 %v971
      %v1578 = vunpack.c.l.b16 %v972
      %v1579 = vunpack.c.l.b16 %v973
      %v1580 = vunpack.c.l.b16 %v974
      %v1581 = vunpack.c.l.b16 %v975
      %v1582 = vunpack.c.l.b16 %v976
      %v1583 = vunpack.c.l.b16 %v977
      %v1584 = vunpack.c.l.b16 %v978
      %v1585 = vunpack.c.l.b16 %v979
      %v1586 = vunpack.c.l.b16 %v980
      %v1587 = vunpack.c.l.b16 %v981
      %v1588 = vunpack.c.l.b16 %v982
      %v1589 = vunpack.c.l.b16 %v983
      %v1590 = vunpack.c.l.b16 %v984
      %v1591 = vunpack.c.l.b16 %v985
      %v1592 = vunpack.c.l.b16 %v986
      %v1593 = vunpack.c.l.b16 %v987
      %v1594 = vunpack.c.l.b16 %v988
      %v1595 = vunpack.c.l.b16 %v989
      %v1596 = vunpack.c.l.b16 %v990
      %v1597 = vunpack.c.l.b16 %v991
      %v1598 = vunpack.c.l.b16 %v992
      %v1599 = vunpack.c.l.b16 %v993
      %v1600 = vunpack.c.l.b16 %v994
      %v1601 = vunpack.c.l.b16 %v995
      %v1602 = vunpack.c.l.b16 %v996
      %v1603 = vunpack.c.l.b16 %v997
      %v1604 = vpack.c.b16 %v1557, %v1556
      %v1605 = vpack.c.b16 %v1559, %v1558
      %v1606 = vpack.c.b16 %v1561, %v1560
      %v1607 = vpack.c.b16 %v1563, %v1562
      %v1608 = vpack.c.b16 %v1565, %v1564
      %v1609 = vpack.c.b16 %v1567, %v1566
      %v1610 = vpack.c.b16 %v1569, %v1568
      %v1611 = vpack.c.b16 %v1571, %v1570
      %v1612 = vpack.c.b16 %v1573, %v1572
      %v1613 = vpack.c.b16 %v1575, %v1574
      %v1614 = vpack.c.b16 %v1577, %v1576
      %v1615 = vpack.c.b16 %v1579, %v1578
      %v1616 = vpack.c.b16 %v1581, %v1580
      %v1617 = vpack.c.b16 %v1583, %v1582
      %v1618 = vpack.c.b16 %v1585, %v1584
      %v1619 = vpack.c.b16 %v1587, %v1586
      %v1620 = vpack.c.b16 %v1589, %v1588
      %v1621 = vpack.c.b16 %v1591, %v1590
      %v1622 = vpack.c.b16 %v1593, %v1592
      %v1623 = vpack.c.b16 %v1595, %v1594
      %v1624 = vpack.c.b16 %v1597, %v1596
      %v1625 = vpack.c.b16 %v1599, %v1598
      %v1626 = vpack.c.b16 %v1601, %v1600
      %v1627 = vpack.c.b16 %v1603, %v1602
      %1652 = vmatprep.subr.bf16.mxu0 0
      %1653 = vmatpush1.bf16.msra.mxu0 %v1611
      %1654 = vmatprep.subr.bf16.mxu0 0
      %1655 = vmatpush1.bf16.msra.mxu0 %v1610
      %1656 = vmatprep.subr.bf16.mxu0 0
      %1657 = vmatpush1.bf16.msra.mxu0 %v1609
      %1658 = vmatprep.subr.bf16.mxu0 0
      %1659 = vmatpush1.bf16.msra.mxu0 %v1608
      %1660 = vmatprep.subr.bf16.mxu0 0
      %1661 = vmatpush1.bf16.msra.mxu0 %v1607
      %1662 = vmatprep.subr.bf16.mxu0 0
      %1663 = vmatpush1.bf16.msra.mxu0 %v1606
      %1664 = vmatprep.subr.bf16.mxu0 0
      %1665 = vmatpush1.bf16.msra.mxu0 %v1605
      %1666 = vmatprep.subr.bf16.mxu0 0
      %1667 = vmatpush1.bf16.msra.mxu0 %v1604
      %1668 = vmatprep.subr.bf16.mxu0 0
      %1669 = vmatpush2.bf16.msra.mxu0 %v1619
      %1670 = vmatprep.subr.bf16.mxu0 0
      %1671 = vmatpush2.bf16.msra.mxu0 %v1618
      %1672 = vmatprep.subr.bf16.mxu0 0
      %1673 = vmatpush2.bf16.msra.mxu0 %v1617
      %1674 = vmatprep.subr.bf16.mxu0 0
      %1675 = vmatpush2.bf16.msra.mxu0 %v1616
      %1676 = vmatprep.subr.bf16.mxu0 0
      %1677 = vmatpush2.bf16.msra.mxu0 %v1615
      %1678 = vmatprep.subr.bf16.mxu0 0
      %1679 = vmatpush2.bf16.msra.mxu0 %v1614
      %1680 = vmatprep.subr.bf16.mxu0 0
      %1681 = vmatpush2.bf16.msra.mxu0 %v1613
      %1682 = vmatprep.subr.bf16.mxu0 0
      %1683 = vmatpush2.bf16.msra.mxu0 %v1612
      %1684 = vmatprep.mubr.bf16.mxu0 %v917
      %1685 = vmatmul.mubr.bf16.gmra.mxu0 %v901
      %v1686 = vpop.f32.mrf.mxu0
      %v1687 = vadd.f32 0.0, %v1686
      %v1688 = vpop.f32.mrf.mxu0
      %v1689 = vpop.f32.mrf.mxu0
      %v1690 = vadd.f32 0.0, %v1689
      %v1691 = vpop.f32.mrf.mxu0
      %1692 = vmatprep.mubr.bf16.mxu0 %v918
      %1693 = vmatmul.mubr.bf16.gmra.mxu0 %v902
      %v1694 = vpop.f32.mrf.mxu0
      %v1695 = vadd.f32 %v1384, %v1694
      %v1696 = vpop.f32.mrf.mxu0
      %v1697 = vpop.f32.mrf.mxu0
      %v1698 = vadd.f32 %v1387, %v1697
      %v1699 = vpop.f32.mrf.mxu0
      %1700 = vmatprep.mubr.bf16.mxu0 %v919
      %1701 = vmatmul.mubr.bf16.gmra.mxu0 %v903
      %v1702 = vpop.f32.mrf.mxu0
      %v1703 = vadd.f32 %v1392, %v1702
      %v1704 = vpop.f32.mrf.mxu0
      %v1705 = vpop.f32.mrf.mxu0
      %v1706 = vadd.f32 %v1395, %v1705
      %v1707 = vpop.f32.mrf.mxu0
      %1708 = vmatprep.mubr.bf16.mxu0 %v920
      %1709 = vmatmul.mubr.bf16.gmra.mxu0 %v904
      %v1710 = vpop.f32.mrf.mxu0
      %v1711 = vadd.f32 %v1400, %v1710
      %v1712 = vpop.f32.mrf.mxu0
      %v1713 = vpop.f32.mrf.mxu0
      %v1714 = vadd.f32 %v1403, %v1713
      %v1715 = vpop.f32.mrf.mxu0
      %1716 = vmatprep.mubr.bf16.mxu0 %v921
      %1717 = vmatmul.mubr.bf16.gmra.mxu0 %v905
      %v1718 = vpop.f32.mrf.mxu0
      %v1719 = vadd.f32 %v1408, %v1718
      %v1720 = vpop.f32.mrf.mxu0
      %v1721 = vpop.f32.mrf.mxu0
      %v1722 = vadd.f32 %v1411, %v1721
      %v1723 = vpop.f32.mrf.mxu0
      %1724 = vmatprep.mubr.bf16.mxu0 %v922
      %1725 = vmatmul.mubr.bf16.gmra.mxu0 %v906
      %v1726 = vpop.f32.mrf.mxu0
      %v1727 = vadd.f32 %v1416, %v1726
      %v1728 = vpop.f32.mrf.mxu0
      %v1729 = vpop.f32.mrf.mxu0
      %v1730 = vadd.f32 %v1419, %v1729
      %v1731 = vpop.f32.mrf.mxu0
      %1732 = vmatprep.mubr.bf16.mxu0 %v923
      %1733 = vmatmul.mubr.bf16.gmra.mxu0 %v907
      %v1734 = vpop.f32.mrf.mxu0
      %v1735 = vadd.f32 %v1424, %v1734
      %v1736 = vpop.f32.mrf.mxu0
      %v1737 = vpop.f32.mrf.mxu0
      %v1738 = vadd.f32 %v1427, %v1737
      %v1739 = vpop.f32.mrf.mxu0
      %1740 = vmatprep.mubr.bf16.mxu0 %v924
      %1741 = vmatmul.mubr.bf16.gmra.mxu0 %v908
      %v1742 = vpop.f32.mrf.mxu0
      %v1743 = vadd.f32 %v1432, %v1742
      %v1744 = vpop.f32.mrf.mxu0
      %v1745 = vpop.f32.mrf.mxu0
      %v1746 = vadd.f32 %v1435, %v1745
      %v1747 = vpop.f32.mrf.mxu0
      %1748 = vmatprep.mubr.bf16.mxu0 %v925
      %1749 = vmatmul.mubr.bf16.gmra.mxu0 %v909
      %v1750 = vpop.f32.mrf.mxu0
      %v1751 = vadd.f32 %v1440, %v1750
      %v1752 = vpop.f32.mrf.mxu0
      %v1753 = vpop.f32.mrf.mxu0
      %v1754 = vadd.f32 %v1443, %v1753
      %v1755 = vpop.f32.mrf.mxu0
      %1756 = vmatprep.mubr.bf16.mxu0 %v926
      %1757 = vmatmul.mubr.bf16.gmra.mxu0 %v910
      %v1758 = vpop.f32.mrf.mxu0
      %v1759 = vadd.f32 %v1448, %v1758
      %v1760 = vpop.f32.mrf.mxu0
      %v1761 = vpop.f32.mrf.mxu0
      %v1762 = vadd.f32 %v1451, %v1761
      %v1763 = vpop.f32.mrf.mxu0
      %1764 = vmatprep.mubr.bf16.mxu0 %v927
      %1765 = vmatmul.mubr.bf16.gmra.mxu0 %v911
      %v1766 = vpop.f32.mrf.mxu0
      %v1767 = vadd.f32 %v1456, %v1766
      %v1768 = vpop.f32.mrf.mxu0
      %v1769 = vpop.f32.mrf.mxu0
      %v1770 = vadd.f32 %v1459, %v1769
      %v1771 = vpop.f32.mrf.mxu0
      %1772 = vmatprep.mubr.bf16.mxu0 %v928
      %1773 = vmatmul.mubr.bf16.gmra.mxu0 %v912
      %v1774 = vpop.f32.mrf.mxu0
      %v1775 = vadd.f32 %v1464, %v1774
      %v1776 = vpop.f32.mrf.mxu0
      %v1777 = vpop.f32.mrf.mxu0
      %v1778 = vadd.f32 %v1467, %v1777
      %v1779 = vpop.f32.mrf.mxu0
      %1780 = vmatprep.mubr.bf16.mxu0 %v929
      %1781 = vmatmul.mubr.bf16.gmra.mxu0 %v913
      %v1782 = vpop.f32.mrf.mxu0
      %v1783 = vadd.f32 %v1472, %v1782
      %v1784 = vpop.f32.mrf.mxu0
      %v1785 = vpop.f32.mrf.mxu0
      %v1786 = vadd.f32 %v1475, %v1785
      %v1787 = vpop.f32.mrf.mxu0
      %1788 = vmatprep.mubr.bf16.mxu0 %v930
      %1789 = vmatmul.mubr.bf16.gmra.mxu0 %v914
      %v1790 = vpop.f32.mrf.mxu0
      %v1791 = vadd.f32 %v1480, %v1790
      %v1792 = vpop.f32.mrf.mxu0
      %v1793 = vpop.f32.mrf.mxu0
      %v1794 = vadd.f32 %v1483, %v1793
      %v1795 = vpop.f32.mrf.mxu0
      %1796 = vmatprep.mubr.bf16.mxu0 %v931
      %1797 = vmatmul.mubr.bf16.gmra.mxu0 %v915
      %v1798 = vpop.f32.mrf.mxu0
      %v1799 = vadd.f32 %v1488, %v1798
      %v1800 = vpop.f32.mrf.mxu0
      %v1801 = vpop.f32.mrf.mxu0
      %v1802 = vadd.f32 %v1491, %v1801
      %v1803 = vpop.f32.mrf.mxu0
      %1804 = vmatprep.mubr.bf16.mxu0 %v932
      %1805 = vmatmul.mubr.bf16.gmra.mxu0 %v916
      %v1806 = vpop.f32.mrf.mxu0
      %v1807 = vadd.f32 %v1496, %v1806
      %v1808 = vpop.f32.mrf.mxu0
      %v1809 = vpop.f32.mrf.mxu0
      %v1810 = vadd.f32 %v1499, %v1809
      %v1811 = vpop.f32.mrf.mxu0
      %1812 = vdwg.mxu0
      %1813 = vmatprep.subr.bf16.mxu0 0
      %1814 = vmatpush1.bf16.msra.mxu0 %v1627
      %1815 = vmatprep.subr.bf16.mxu0 0
      %1816 = vmatpush1.bf16.msra.mxu0 %v1626
      %1817 = vmatprep.subr.bf16.mxu0 0
      %1818 = vmatpush1.bf16.msra.mxu0 %v1625
      %1819 = vmatprep.subr.bf16.mxu0 0
      %1820 = vmatpush1.bf16.msra.mxu0 %v1624
      %1821 = vmatprep.subr.bf16.mxu0 0
      %1822 = vmatpush1.bf16.msra.mxu0 %v1623
      %1823 = vmatprep.subr.bf16.mxu0 0
      %1824 = vmatpush1.bf16.msra.mxu0 %v1622
      %1825 = vmatprep.subr.bf16.mxu0 0
      %1826 = vmatpush1.bf16.msra.mxu0 %v1621
      %1827 = vmatprep.subr.bf16.mxu0 0
      %1828 = vmatpush1.bf16.msra.mxu0 %v1620
      %1829 = vmatprep.subr.bf16.mxu0 0
      %1830 = vmatpush2.bf16.msra.mxu0 0
      %1831 = vmatprep.subr.bf16.mxu0 0
      %1832 = vmatpush2.bf16.msra.mxu0 0
      %1833 = vmatprep.subr.bf16.mxu0 0
      %1834 = vmatpush2.bf16.msra.mxu0 0
      %1835 = vmatprep.subr.bf16.mxu0 0
      %1836 = vmatpush2.bf16.msra.mxu0 0
      %1837 = vmatprep.subr.bf16.mxu0 0
      %1838 = vmatpush2.bf16.msra.mxu0 0
      %1839 = vmatprep.subr.bf16.mxu0 0
      %1840 = vmatpush2.bf16.msra.mxu0 0
      %1841 = vmatprep.subr.bf16.mxu0 0
      %1842 = vmatpush2.bf16.msra.mxu0 0
      %1843 = vmatprep.subr.bf16.mxu0 0
      %1844 = vmatpush2.bf16.msra.mxu0 0
      %1845 = vmatprep.mubr.bf16.mxu0 0
      %1846 = vmatmul.mubr.bf16.gmra.mxu0 %v933
      %v1847 = vpop.f32.mrf.mxu0
      %v1848 = vadd.f32 %v1687, %v1847
      %v1849 = vpop.f32.mrf.mxu0
      %v1850 = vpop.f32.mrf.mxu0
      %v1851 = vadd.f32 %v1690, %v1850
      %v1852 = vpop.f32.mrf.mxu0
      %1853 = vmatprep.mubr.bf16.mxu0 0
      %1854 = vmatmul.mubr.bf16.gmra.mxu0 %v934
      %v1855 = vpop.f32.mrf.mxu0
      %v1856 = vadd.f32 %v1695, %v1855
      %v1857 = vpop.f32.mrf.mxu0
      %v1858 = vpop.f32.mrf.mxu0
      %v1859 = vadd.f32 %v1698, %v1858
      %v1860 = vpop.f32.mrf.mxu0
      %1861 = vmatprep.mubr.bf16.mxu0 0
      %1862 = vmatmul.mubr.bf16.gmra.mxu0 %v935
      %v1863 = vpop.f32.mrf.mxu0
      %v1864 = vadd.f32 %v1703, %v1863
      %v1865 = vpop.f32.mrf.mxu0
      %v1866 = vpop.f32.mrf.mxu0
      %v1867 = vadd.f32 %v1706, %v1866
      %v1868 = vpop.f32.mrf.mxu0
      %1869 = vmatprep.mubr.bf16.mxu0 0
      %1870 = vmatmul.mubr.bf16.gmra.mxu0 %v936
      %v1871 = vpop.f32.mrf.mxu0
      %v1872 = vadd.f32 %v1711, %v1871
      %v1873 = vpop.f32.mrf.mxu0
      %v1874 = vpop.f32.mrf.mxu0
      %v1875 = vadd.f32 %v1714, %v1874
      %v1876 = vpop.f32.mrf.mxu0
      %1877 = vmatprep.mubr.bf16.mxu0 0
      %1878 = vmatmul.mubr.bf16.gmra.mxu0 %v937
      %v1879 = vpop.f32.mrf.mxu0
      %v1880 = vadd.f32 %v1719, %v1879
      %v1881 = vpop.f32.mrf.mxu0
      %v1882 = vpop.f32.mrf.mxu0
      %v1883 = vadd.f32 %v1722, %v1882
      %v1884 = vpop.f32.mrf.mxu0
      %1885 = vmatprep.mubr.bf16.mxu0 0
      %1886 = vmatmul.mubr.bf16.gmra.mxu0 %v938
      %v1887 = vpop.f32.mrf.mxu0
      %v1888 = vadd.f32 %v1727, %v1887
      %v1889 = vpop.f32.mrf.mxu0
      %v1890 = vpop.f32.mrf.mxu0
      %v1891 = vadd.f32 %v1730, %v1890
      %v1892 = vpop.f32.mrf.mxu0
      %1893 = vmatprep.mubr.bf16.mxu0 0
      %1894 = vmatmul.mubr.bf16.gmra.mxu0 %v939
      %v1895 = vpop.f32.mrf.mxu0
      %v1896 = vadd.f32 %v1735, %v1895
      %v1897 = vpop.f32.mrf.mxu0
      %v1898 = vpop.f32.mrf.mxu0
      %v1899 = vadd.f32 %v1738, %v1898
      %v1900 = vpop.f32.mrf.mxu0
      %1901 = vmatprep.mubr.bf16.mxu0 0
      %1902 = vmatmul.mubr.bf16.gmra.mxu0 %v940
      %v1903 = vpop.f32.mrf.mxu0
      %v1904 = vadd.f32 %v1743, %v1903
      %v1905 = vpop.f32.mrf.mxu0
      %v1906 = vpop.f32.mrf.mxu0
      %v1907 = vadd.f32 %v1746, %v1906
      %v1908 = vpop.f32.mrf.mxu0
      %1909 = vmatprep.mubr.bf16.mxu0 0
      %1910 = vmatmul.mubr.bf16.gmra.mxu0 %v941
      %v1911 = vpop.f32.mrf.mxu0
      %v1912 = vadd.f32 %v1751, %v1911
      %v1913 = vpop.f32.mrf.mxu0
      %v1914 = vpop.f32.mrf.mxu0
      %v1915 = vadd.f32 %v1754, %v1914
      %v1916 = vpop.f32.mrf.mxu0
      %1917 = vmatprep.mubr.bf16.mxu0 0
      %1918 = vmatmul.mubr.bf16.gmra.mxu0 %v942
      %v1919 = vpop.f32.mrf.mxu0
      %v1920 = vadd.f32 %v1759, %v1919
      %v1921 = vpop.f32.mrf.mxu0
      %v1922 = vpop.f32.mrf.mxu0
      %v1923 = vadd.f32 %v1762, %v1922
      %v1924 = vpop.f32.mrf.mxu0
      %1925 = vmatprep.mubr.bf16.mxu0 0
      %1926 = vmatmul.mubr.bf16.gmra.mxu0 %v943
      %v1927 = vpop.f32.mrf.mxu0
      %v1928 = vadd.f32 %v1767, %v1927
      %v1929 = vpop.f32.mrf.mxu0
      %v1930 = vpop.f32.mrf.mxu0
      %v1931 = vadd.f32 %v1770, %v1930
      %v1932 = vpop.f32.mrf.mxu0
      %1933 = vmatprep.mubr.bf16.mxu0 0
      %1934 = vmatmul.mubr.bf16.gmra.mxu0 %v944
      %v1935 = vpop.f32.mrf.mxu0
      %v1936 = vadd.f32 %v1775, %v1935
      %v1937 = vpop.f32.mrf.mxu0
      %v1938 = vpop.f32.mrf.mxu0
      %v1939 = vadd.f32 %v1778, %v1938
      %v1940 = vpop.f32.mrf.mxu0
      %1941 = vmatprep.mubr.bf16.mxu0 0
      %1942 = vmatmul.mubr.bf16.gmra.mxu0 %v945
      %v1943 = vpop.f32.mrf.mxu0
      %v1944 = vadd.f32 %v1783, %v1943
      %v1945 = vpop.f32.mrf.mxu0
      %v1946 = vpop.f32.mrf.mxu0
      %v1947 = vadd.f32 %v1786, %v1946
      %v1948 = vpop.f32.mrf.mxu0
      %1949 = vmatprep.mubr.bf16.mxu0 0
      %1950 = vmatmul.mubr.bf16.gmra.mxu0 %v946
      %v1951 = vpop.f32.mrf.mxu0
      %v1952 = vadd.f32 %v1791, %v1951
      %v1953 = vpop.f32.mrf.mxu0
      %v1954 = vpop.f32.mrf.mxu0
      %v1955 = vadd.f32 %v1794, %v1954
      %v1956 = vpop.f32.mrf.mxu0
      %1957 = vmatprep.mubr.bf16.mxu0 0
      %1958 = vmatmul.mubr.bf16.gmra.mxu0 %v947
      %v1959 = vpop.f32.mrf.mxu0
      %v1960 = vadd.f32 %v1799, %v1959
      %v1961 = vpop.f32.mrf.mxu0
      %v1962 = vpop.f32.mrf.mxu0
      %v1963 = vadd.f32 %v1802, %v1962
      %v1964 = vpop.f32.mrf.mxu0
      %1965 = vmatprep.mubr.bf16.mxu0 0
      %1966 = vmatmul.mubr.bf16.gmra.mxu0 %v948
      %v1967 = vpop.f32.mrf.mxu0
      %v1968 = vadd.f32 %v1807, %v1967
      %v1969 = vpop.f32.mrf.mxu0
      %v1970 = vpop.f32.mrf.mxu0
      %v1971 = vadd.f32 %v1810, %v1970
      %v1972 = vpop.f32.mrf.mxu0
      %1973 = vdwg.mxu0
      %s1974 = scalar_lea.vmem %s1, 384
      %v1975 = vld [vmem:[%s1974] sm:$0xf]
      %v1976 = vld [vmem:[%s1974 + $0x4] sm:$0xf]
      %v1977 = vld [vmem:[%s1974 + $0x8] sm:$0xf]
      %v1978 = vld [vmem:[%s1974 + $0xc] sm:$0xf]
      %v1979 = vld [vmem:[%s1974 + $0x10] sm:$0xf]
      %v1980 = vld [vmem:[%s1974 + $0x14] sm:$0xf]
      %v1981 = vld [vmem:[%s1974 + $0x18] sm:$0xf]
      %v1982 = vld [vmem:[%s1974 + $0x1c] sm:$0xf]
      %v1983 = vld [vmem:[%s1974 + $0x20] sm:$0xf]
      %v1984 = vld [vmem:[%s1974 + $0x24] sm:$0xf]
      %v1985 = vld [vmem:[%s1974 + $0x28] sm:$0xf]
      %v1986 = vld [vmem:[%s1974 + $0x2c] sm:$0xf]
      %v1987 = vld [vmem:[%s1974 + $0x30] sm:$0xf]
      %v1988 = vld [vmem:[%s1974 + $0x34] sm:$0xf]
      %v1989 = vld [vmem:[%s1974 + $0x38] sm:$0xf]
      %v1990 = vld [vmem:[%s1974 + $0x3c] sm:$0xf]
      %v1991 = vld [vmem:[%s1974 + $0x40] sm:$0xf]
      %v1992 = vld [vmem:[%s1974 + $0x44] sm:$0xf]
      %v1993 = vld [vmem:[%s1974 + $0x48] sm:$0xf]
      %v1994 = vld [vmem:[%s1974 + $0x4c] sm:$0xf]
      %v1995 = vld [vmem:[%s1974 + $0x50] sm:$0xf]
      %v1996 = vld [vmem:[%s1974 + $0x54] sm:$0xf]
      %v1997 = vld [vmem:[%s1974 + $0x58] sm:$0xf]
      %v1998 = vld [vmem:[%s1974 + $0x5c] sm:$0xf]
      %v1999 = vld [vmem:[%s1974 + $0x60] sm:$0xf]
      %v2000 = vld [vmem:[%s1974 + $0x64] sm:$0xf]
      %v2001 = vld [vmem:[%s1974 + $0x68] sm:$0xf]
      %v2002 = vld [vmem:[%s1974 + $0x6c] sm:$0xf]
      %v2003 = vld [vmem:[%s1974 + $0x70] sm:$0xf]
      %v2004 = vld [vmem:[%s1974 + $0x74] sm:$0xf]
      %v2005 = vld [vmem:[%s1974 + $0x78] sm:$0xf]
      %v2006 = vld [vmem:[%s1974 + $0x7c] sm:$0xf]
      %v2007 = vld [vmem:[%s1974 + $0x80] sm:$0xf]
      %v2008 = vld [vmem:[%s1974 + $0x84] sm:$0xf]
      %v2009 = vld [vmem:[%s1974 + $0x88] sm:$0xf]
      %v2010 = vld [vmem:[%s1974 + $0x8c] sm:$0xf]
      %v2011 = vld [vmem:[%s1974 + $0x90] sm:$0xf]
      %v2012 = vld [vmem:[%s1974 + $0x94] sm:$0xf]
      %v2013 = vld [vmem:[%s1974 + $0x98] sm:$0xf]
      %v2014 = vld [vmem:[%s1974 + $0x9c] sm:$0xf]
      %v2015 = vld [vmem:[%s1974 + $0xa0] sm:$0xf]
      %v2016 = vld [vmem:[%s1974 + $0xa4] sm:$0xf]
      %v2017 = vld [vmem:[%s1974 + $0xa8] sm:$0xf]
      %v2018 = vld [vmem:[%s1974 + $0xac] sm:$0xf]
      %v2019 = vld [vmem:[%s1974 + $0xb0] sm:$0xf]
      %v2020 = vld [vmem:[%s1974 + $0xb4] sm:$0xf]
      %v2021 = vld [vmem:[%s1974 + $0xb8] sm:$0xf]
      %v2022 = vld [vmem:[%s1974 + $0xbc] sm:$0xf]
      %v2071 = vunpack.c.l.b16 %v1975
      %v2072 = vunpack.c.l.b16 %v1976
      %v2073 = vunpack.c.l.b16 %v1977
      %v2074 = vunpack.c.l.b16 %v1978
      %v2075 = vunpack.c.l.b16 %v1979
      %v2076 = vunpack.c.l.b16 %v1980
      %v2077 = vunpack.c.l.b16 %v1981
      %v2078 = vunpack.c.l.b16 %v1982
      %v2079 = vunpack.c.l.b16 %v1983
      %v2080 = vunpack.c.l.b16 %v1984
      %v2081 = vunpack.c.l.b16 %v1985
      %v2082 = vunpack.c.l.b16 %v1986
      %v2083 = vunpack.c.l.b16 %v1987
      %v2084 = vunpack.c.l.b16 %v1988
      %v2085 = vunpack.c.l.b16 %v1989
      %v2086 = vunpack.c.l.b16 %v1990
      %v2087 = vunpack.c.l.b16 %v1991
      %v2088 = vunpack.c.l.b16 %v1992
      %v2089 = vunpack.c.l.b16 %v1993
      %v2090 = vunpack.c.l.b16 %v1994
      %v2091 = vunpack.c.l.b16 %v1995
      %v2092 = vunpack.c.l.b16 %v1996
      %v2093 = vunpack.c.l.b16 %v1997
      %v2094 = vunpack.c.l.b16 %v1998
      %v2095 = vunpack.c.l.b16 %v1999
      %v2096 = vunpack.c.l.b16 %v2000
      %v2097 = vunpack.c.l.b16 %v2001
      %v2098 = vunpack.c.l.b16 %v2002
      %v2099 = vunpack.c.l.b16 %v2003
      %v2100 = vunpack.c.l.b16 %v2004
      %v2101 = vunpack.c.l.b16 %v2005
      %v2102 = vunpack.c.l.b16 %v2006
      %v2103 = vunpack.c.l.b16 %v2007
      %v2104 = vunpack.c.l.b16 %v2008
      %v2105 = vunpack.c.l.b16 %v2009
      %v2106 = vunpack.c.l.b16 %v2010
      %v2107 = vunpack.c.l.b16 %v2011
      %v2108 = vunpack.c.l.b16 %v2012
      %v2109 = vunpack.c.l.b16 %v2013
      %v2110 = vunpack.c.l.b16 %v2014
      %v2111 = vunpack.c.l.b16 %v2015
      %v2112 = vunpack.c.l.b16 %v2016
      %v2113 = vunpack.c.l.b16 %v2017
      %v2114 = vunpack.c.l.b16 %v2018
      %v2115 = vunpack.c.l.b16 %v2019
      %v2116 = vunpack.c.l.b16 %v2020
      %v2117 = vunpack.c.l.b16 %v2021
      %v2118 = vunpack.c.l.b16 %v2022
      %v2119 = vpack.c.b16 %v2072, %v2071
      %v2120 = vpack.c.b16 %v2074, %v2073
      %v2121 = vpack.c.b16 %v2076, %v2075
      %v2122 = vpack.c.b16 %v2078, %v2077
      %v2123 = vpack.c.b16 %v2080, %v2079
      %v2124 = vpack.c.b16 %v2082, %v2081
      %v2125 = vpack.c.b16 %v2084, %v2083
      %v2126 = vpack.c.b16 %v2086, %v2085
      %v2127 = vpack.c.b16 %v2088, %v2087
      %v2128 = vpack.c.b16 %v2090, %v2089
      %v2129 = vpack.c.b16 %v2092, %v2091
      %v2130 = vpack.c.b16 %v2094, %v2093
      %v2131 = vpack.c.b16 %v2096, %v2095
      %v2132 = vpack.c.b16 %v2098, %v2097
      %v2133 = vpack.c.b16 %v2100, %v2099
      %v2134 = vpack.c.b16 %v2102, %v2101
      %v2135 = vpack.c.b16 %v2104, %v2103
      %v2136 = vpack.c.b16 %v2106, %v2105
      %v2137 = vpack.c.b16 %v2108, %v2107
      %v2138 = vpack.c.b16 %v2110, %v2109
      %v2139 = vpack.c.b16 %v2112, %v2111
      %v2140 = vpack.c.b16 %v2114, %v2113
      %v2141 = vpack.c.b16 %v2116, %v2115
      %v2142 = vpack.c.b16 %v2118, %v2117
      %2167 = vmatprep.subr.bf16.mxu0 0
      %2168 = vmatpush1.bf16.msra.mxu0 %v2126
      %2169 = vmatprep.subr.bf16.mxu0 0
      %2170 = vmatpush1.bf16.msra.mxu0 %v2125
      %2171 = vmatprep.subr.bf16.mxu0 0
      %2172 = vmatpush1.bf16.msra.mxu0 %v2124
      %2173 = vmatprep.subr.bf16.mxu0 0
      %2174 = vmatpush1.bf16.msra.mxu0 %v2123
      %2175 = vmatprep.subr.bf16.mxu0 0
      %2176 = vmatpush1.bf16.msra.mxu0 %v2122
      %2177 = vmatprep.subr.bf16.mxu0 0
      %2178 = vmatpush1.bf16.msra.mxu0 %v2121
      %2179 = vmatprep.subr.bf16.mxu0 0
      %2180 = vmatpush1.bf16.msra.mxu0 %v2120
      %2181 = vmatprep.subr.bf16.mxu0 0
      %2182 = vmatpush1.bf16.msra.mxu0 %v2119
      %2183 = vmatprep.subr.bf16.mxu0 0
      %2184 = vmatpush2.bf16.msra.mxu0 %v2134
      %2185 = vmatprep.subr.bf16.mxu0 0
      %2186 = vmatpush2.bf16.msra.mxu0 %v2133
      %2187 = vmatprep.subr.bf16.mxu0 0
      %2188 = vmatpush2.bf16.msra.mxu0 %v2132
      %2189 = vmatprep.subr.bf16.mxu0 0
      %2190 = vmatpush2.bf16.msra.mxu0 %v2131
      %2191 = vmatprep.subr.bf16.mxu0 0
      %2192 = vmatpush2.bf16.msra.mxu0 %v2130
      %2193 = vmatprep.subr.bf16.mxu0 0
      %2194 = vmatpush2.bf16.msra.mxu0 %v2129
      %2195 = vmatprep.subr.bf16.mxu0 0
      %2196 = vmatpush2.bf16.msra.mxu0 %v2128
      %2197 = vmatprep.subr.bf16.mxu0 0
      %2198 = vmatpush2.bf16.msra.mxu0 %v2127
      %2199 = vmatprep.mubr.bf16.mxu0 %v917
      %2200 = vmatmul.mubr.bf16.gmra.mxu0 %v901
      %v2201 = vpop.f32.mrf.mxu0
      %v2202 = vpop.f32.mrf.mxu0
      %v2203 = vpop.f32.mrf.mxu0
      %v2204 = vpop.f32.mrf.mxu0
      %2205 = vmatprep.mubr.bf16.mxu0 %v918
      %2206 = vmatmul.mubr.bf16.gmra.mxu0 %v902
      %v2207 = vpop.f32.mrf.mxu0
      %v2208 = vadd.f32 0.0, %v2207
      %v2209 = vpop.f32.mrf.mxu0
      %v2210 = vpop.f32.mrf.mxu0
      %v2211 = vadd.f32 0.0, %v2210
      %v2212 = vpop.f32.mrf.mxu0
      %2213 = vmatprep.mubr.bf16.mxu0 %v919
      %2214 = vmatmul.mubr.bf16.gmra.mxu0 %v903
      %v2215 = vpop.f32.mrf.mxu0
      %v2216 = vadd.f32 0.0, %v2215
      %v2217 = vpop.f32.mrf.mxu0
      %v2218 = vpop.f32.mrf.mxu0
      %v2219 = vadd.f32 0.0, %v2218
      %v2220 = vpop.f32.mrf.mxu0
      %2221 = vmatprep.mubr.bf16.mxu0 %v920
      %2222 = vmatmul.mubr.bf16.gmra.mxu0 %v904
      %v2223 = vpop.f32.mrf.mxu0
      %v2224 = vadd.f32 0.0, %v2223
      %v2225 = vpop.f32.mrf.mxu0
      %v2226 = vpop.f32.mrf.mxu0
      %v2227 = vadd.f32 0.0, %v2226
      %v2228 = vpop.f32.mrf.mxu0
      %2229 = vmatprep.mubr.bf16.mxu0 %v921
      %2230 = vmatmul.mubr.bf16.gmra.mxu0 %v905
      %v2231 = vpop.f32.mrf.mxu0
      %v2232 = vadd.f32 0.0, %v2231
      %v2233 = vpop.f32.mrf.mxu0
      %v2234 = vpop.f32.mrf.mxu0
      %v2235 = vadd.f32 0.0, %v2234
      %v2236 = vpop.f32.mrf.mxu0
      %2237 = vmatprep.mubr.bf16.mxu0 %v922
      %2238 = vmatmul.mubr.bf16.gmra.mxu0 %v906
      %v2239 = vpop.f32.mrf.mxu0
      %v2240 = vadd.f32 0.0, %v2239
      %v2241 = vpop.f32.mrf.mxu0
      %v2242 = vpop.f32.mrf.mxu0
      %v2243 = vadd.f32 0.0, %v2242
      %v2244 = vpop.f32.mrf.mxu0
      %2245 = vmatprep.mubr.bf16.mxu0 %v923
      %2246 = vmatmul.mubr.bf16.gmra.mxu0 %v907
      %v2247 = vpop.f32.mrf.mxu0
      %v2248 = vadd.f32 0.0, %v2247
      %v2249 = vpop.f32.mrf.mxu0
      %v2250 = vpop.f32.mrf.mxu0
      %v2251 = vadd.f32 0.0, %v2250
      %v2252 = vpop.f32.mrf.mxu0
      %2253 = vmatprep.mubr.bf16.mxu0 %v924
      %2254 = vmatmul.mubr.bf16.gmra.mxu0 %v908
      %v2255 = vpop.f32.mrf.mxu0
      %v2256 = vadd.f32 0.0, %v2255
      %v2257 = vpop.f32.mrf.mxu0
      %v2258 = vpop.f32.mrf.mxu0
      %v2259 = vadd.f32 0.0, %v2258
      %v2260 = vpop.f32.mrf.mxu0
      %2261 = vmatprep.mubr.bf16.mxu0 %v925
      %2262 = vmatmul.mubr.bf16.gmra.mxu0 %v909
      %v2263 = vpop.f32.mrf.mxu0
      %v2264 = vadd.f32 0.0, %v2263
      %v2265 = vpop.f32.mrf.mxu0
      %v2266 = vpop.f32.mrf.mxu0
      %v2267 = vadd.f32 0.0, %v2266
      %v2268 = vpop.f32.mrf.mxu0
      %2269 = vmatprep.mubr.bf16.mxu0 %v926
      %2270 = vmatmul.mubr.bf16.gmra.mxu0 %v910
      %v2271 = vpop.f32.mrf.mxu0
      %v2272 = vadd.f32 0.0, %v2271
      %v2273 = vpop.f32.mrf.mxu0
      %v2274 = vpop.f32.mrf.mxu0
      %v2275 = vadd.f32 0.0, %v2274
      %v2276 = vpop.f32.mrf.mxu0
      %2277 = vmatprep.mubr.bf16.mxu0 %v927
      %2278 = vmatmul.mubr.bf16.gmra.mxu0 %v911
      %v2279 = vpop.f32.mrf.mxu0
      %v2280 = vadd.f32 0.0, %v2279
      %v2281 = vpop.f32.mrf.mxu0
      %v2282 = vpop.f32.mrf.mxu0
      %v2283 = vadd.f32 0.0, %v2282
      %v2284 = vpop.f32.mrf.mxu0
      %2285 = vmatprep.mubr.bf16.mxu0 %v928
      %2286 = vmatmul.mubr.bf16.gmra.mxu0 %v912
      %v2287 = vpop.f32.mrf.mxu0
      %v2288 = vadd.f32 0.0, %v2287
      %v2289 = vpop.f32.mrf.mxu0
      %v2290 = vpop.f32.mrf.mxu0
      %v2291 = vadd.f32 0.0, %v2290
      %v2292 = vpop.f32.mrf.mxu0
      %2293 = vmatprep.mubr.bf16.mxu0 %v929
      %2294 = vmatmul.mubr.bf16.gmra.mxu0 %v913
      %v2295 = vpop.f32.mrf.mxu0
      %v2296 = vadd.f32 0.0, %v2295
      %v2297 = vpop.f32.mrf.mxu0
      %v2298 = vpop.f32.mrf.mxu0
      %v2299 = vadd.f32 0.0, %v2298
      %v2300 = vpop.f32.mrf.mxu0
      %2301 = vmatprep.mubr.bf16.mxu0 %v930
      %2302 = vmatmul.mubr.bf16.gmra.mxu0 %v914
      %v2303 = vpop.f32.mrf.mxu0
      %v2304 = vadd.f32 0.0, %v2303
      %v2305 = vpop.f32.mrf.mxu0
      %v2306 = vpop.f32.mrf.mxu0
      %v2307 = vadd.f32 0.0, %v2306
      %v2308 = vpop.f32.mrf.mxu0
      %2309 = vmatprep.mubr.bf16.mxu0 %v931
      %2310 = vmatmul.mubr.bf16.gmra.mxu0 %v915
      %v2311 = vpop.f32.mrf.mxu0
      %v2312 = vadd.f32 0.0, %v2311
      %v2313 = vpop.f32.mrf.mxu0
      %v2314 = vpop.f32.mrf.mxu0
      %v2315 = vadd.f32 0.0, %v2314
      %v2316 = vpop.f32.mrf.mxu0
      %2317 = vmatprep.mubr.bf16.mxu0 %v932
      %2318 = vmatmul.mubr.bf16.gmra.mxu0 %v916
      %v2319 = vpop.f32.mrf.mxu0
      %v2320 = vadd.f32 0.0, %v2319
      %v2321 = vpop.f32.mrf.mxu0
      %v2322 = vpop.f32.mrf.mxu0
      %v2323 = vadd.f32 0.0, %v2322
      %v2324 = vpop.f32.mrf.mxu0
      %2325 = vdwg.mxu0
      %2326 = vmatprep.subr.bf16.mxu0 0
      %2327 = vmatpush1.bf16.msra.mxu0 %v2142
      %2328 = vmatprep.subr.bf16.mxu0 0
      %2329 = vmatpush1.bf16.msra.mxu0 %v2141
      %2330 = vmatprep.subr.bf16.mxu0 0
      %2331 = vmatpush1.bf16.msra.mxu0 %v2140
      %2332 = vmatprep.subr.bf16.mxu0 0
      %2333 = vmatpush1.bf16.msra.mxu0 %v2139
      %2334 = vmatprep.subr.bf16.mxu0 0
      %2335 = vmatpush1.bf16.msra.mxu0 %v2138
      %2336 = vmatprep.subr.bf16.mxu0 0
      %2337 = vmatpush1.bf16.msra.mxu0 %v2137
      %2338 = vmatprep.subr.bf16.mxu0 0
      %2339 = vmatpush1.bf16.msra.mxu0 %v2136
      %2340 = vmatprep.subr.bf16.mxu0 0
      %2341 = vmatpush1.bf16.msra.mxu0 %v2135
      %2342 = vmatprep.subr.bf16.mxu0 0
      %2343 = vmatpush2.bf16.msra.mxu0 0
      %2344 = vmatprep.subr.bf16.mxu0 0
      %2345 = vmatpush2.bf16.msra.mxu0 0
      %2346 = vmatprep.subr.bf16.mxu0 0
      %2347 = vmatpush2.bf16.msra.mxu0 0
      %2348 = vmatprep.subr.bf16.mxu0 0
      %2349 = vmatpush2.bf16.msra.mxu0 0
      %2350 = vmatprep.subr.bf16.mxu0 0
      %2351 = vmatpush2.bf16.msra.mxu0 0
      %2352 = vmatprep.subr.bf16.mxu0 0
      %2353 = vmatpush2.bf16.msra.mxu0 0
      %2354 = vmatprep.subr.bf16.mxu0 0
      %2355 = vmatpush2.bf16.msra.mxu0 0
      %2356 = vmatprep.subr.bf16.mxu0 0
      %2357 = vmatpush2.bf16.msra.mxu0 0
      %2358 = vmatprep.mubr.bf16.mxu0 0
      %2359 = vmatmul.mubr.bf16.gmra.mxu0 %v933
      %v2360 = vpop.f32.mrf.mxu0
      %v2361 = vpop.f32.mrf.mxu0
      %v2362 = vpop.f32.mrf.mxu0
      %v2363 = vpop.f32.mrf.mxu0
      %2364 = vmatprep.mubr.bf16.mxu0 0
      %2365 = vmatmul.mubr.bf16.gmra.mxu0 %v934
      %v2366 = vpop.f32.mrf.mxu0
      %v2367 = vadd.f32 %v2208, %v2366
      %v2368 = vpop.f32.mrf.mxu0
      %v2369 = vpop.f32.mrf.mxu0
      %v2370 = vadd.f32 %v2211, %v2369
      %v2371 = vpop.f32.mrf.mxu0
      %2372 = vmatprep.mubr.bf16.mxu0 0
      %2373 = vmatmul.mubr.bf16.gmra.mxu0 %v935
      %v2374 = vpop.f32.mrf.mxu0
      %v2375 = vadd.f32 %v2216, %v2374
      %v2376 = vpop.f32.mrf.mxu0
      %v2377 = vpop.f32.mrf.mxu0
      %v2378 = vadd.f32 %v2219, %v2377
      %v2379 = vpop.f32.mrf.mxu0
      %2380 = vmatprep.mubr.bf16.mxu0 0
      %2381 = vmatmul.mubr.bf16.gmra.mxu0 %v936
      %v2382 = vpop.f32.mrf.mxu0
      %v2383 = vadd.f32 %v2224, %v2382
      %v2384 = vpop.f32.mrf.mxu0
      %v2385 = vpop.f32.mrf.mxu0
      %v2386 = vadd.f32 %v2227, %v2385
      %v2387 = vpop.f32.mrf.mxu0
      %2388 = vmatprep.mubr.bf16.mxu0 0
      %2389 = vmatmul.mubr.bf16.gmra.mxu0 %v937
      %v2390 = vpop.f32.mrf.mxu0
      %v2391 = vadd.f32 %v2232, %v2390
      %v2392 = vpop.f32.mrf.mxu0
      %v2393 = vpop.f32.mrf.mxu0
      %v2394 = vadd.f32 %v2235, %v2393
      %v2395 = vpop.f32.mrf.mxu0
      %2396 = vmatprep.mubr.bf16.mxu0 0
      %2397 = vmatmul.mubr.bf16.gmra.mxu0 %v938
      %v2398 = vpop.f32.mrf.mxu0
      %v2399 = vadd.f32 %v2240, %v2398
      %v2400 = vpop.f32.mrf.mxu0
      %v2401 = vpop.f32.mrf.mxu0
      %v2402 = vadd.f32 %v2243, %v2401
      %v2403 = vpop.f32.mrf.mxu0
      %2404 = vmatprep.mubr.bf16.mxu0 0
      %2405 = vmatmul.mubr.bf16.gmra.mxu0 %v939
      %v2406 = vpop.f32.mrf.mxu0
      %v2407 = vadd.f32 %v2248, %v2406
      %v2408 = vpop.f32.mrf.mxu0
      %v2409 = vpop.f32.mrf.mxu0
      %v2410 = vadd.f32 %v2251, %v2409
      %v2411 = vpop.f32.mrf.mxu0
      %2412 = vmatprep.mubr.bf16.mxu0 0
      %2413 = vmatmul.mubr.bf16.gmra.mxu0 %v940
      %v2414 = vpop.f32.mrf.mxu0
      %v2415 = vadd.f32 %v2256, %v2414
      %v2416 = vpop.f32.mrf.mxu0
      %v2417 = vpop.f32.mrf.mxu0
      %v2418 = vadd.f32 %v2259, %v2417
      %v2419 = vpop.f32.mrf.mxu0
      %2420 = vmatprep.mubr.bf16.mxu0 0
      %2421 = vmatmul.mubr.bf16.gmra.mxu0 %v941
      %v2422 = vpop.f32.mrf.mxu0
      %v2423 = vadd.f32 %v2264, %v2422
      %v2424 = vpop.f32.mrf.mxu0
      %v2425 = vpop.f32.mrf.mxu0
      %v2426 = vadd.f32 %v2267, %v2425
      %v2427 = vpop.f32.mrf.mxu0
      %2428 = vmatprep.mubr.bf16.mxu0 0
      %2429 = vmatmul.mubr.bf16.gmra.mxu0 %v942
      %v2430 = vpop.f32.mrf.mxu0
      %v2431 = vadd.f32 %v2272, %v2430
      %v2432 = vpop.f32.mrf.mxu0
      %v2433 = vpop.f32.mrf.mxu0
      %v2434 = vadd.f32 %v2275, %v2433
      %v2435 = vpop.f32.mrf.mxu0
      %2436 = vmatprep.mubr.bf16.mxu0 0
      %2437 = vmatmul.mubr.bf16.gmra.mxu0 %v943
      %v2438 = vpop.f32.mrf.mxu0
      %v2439 = vadd.f32 %v2280, %v2438
      %v2440 = vpop.f32.mrf.mxu0
      %v2441 = vpop.f32.mrf.mxu0
      %v2442 = vadd.f32 %v2283, %v2441
      %v2443 = vpop.f32.mrf.mxu0
      %2444 = vmatprep.mubr.bf16.mxu0 0
      %2445 = vmatmul.mubr.bf16.gmra.mxu0 %v944
      %v2446 = vpop.f32.mrf.mxu0
      %v2447 = vadd.f32 %v2288, %v2446
      %v2448 = vpop.f32.mrf.mxu0
      %v2449 = vpop.f32.mrf.mxu0
      %v2450 = vadd.f32 %v2291, %v2449
      %v2451 = vpop.f32.mrf.mxu0
      %2452 = vmatprep.mubr.bf16.mxu0 0
      %2453 = vmatmul.mubr.bf16.gmra.mxu0 %v945
      %v2454 = vpop.f32.mrf.mxu0
      %v2455 = vadd.f32 %v2296, %v2454
      %v2456 = vpop.f32.mrf.mxu0
      %v2457 = vpop.f32.mrf.mxu0
      %v2458 = vadd.f32 %v2299, %v2457
      %v2459 = vpop.f32.mrf.mxu0
      %2460 = vmatprep.mubr.bf16.mxu0 0
      %2461 = vmatmul.mubr.bf16.gmra.mxu0 %v946
      %v2462 = vpop.f32.mrf.mxu0
      %v2463 = vadd.f32 %v2304, %v2462
      %v2464 = vpop.f32.mrf.mxu0
      %v2465 = vpop.f32.mrf.mxu0
      %v2466 = vadd.f32 %v2307, %v2465
      %v2467 = vpop.f32.mrf.mxu0
      %2468 = vmatprep.mubr.bf16.mxu0 0
      %2469 = vmatmul.mubr.bf16.gmra.mxu0 %v947
      %v2470 = vpop.f32.mrf.mxu0
      %v2471 = vadd.f32 %v2312, %v2470
      %v2472 = vpop.f32.mrf.mxu0
      %v2473 = vpop.f32.mrf.mxu0
      %v2474 = vadd.f32 %v2315, %v2473
      %v2475 = vpop.f32.mrf.mxu0
      %2476 = vmatprep.mubr.bf16.mxu0 0
      %2477 = vmatmul.mubr.bf16.gmra.mxu0 %v948
      %v2478 = vpop.f32.mrf.mxu0
      %v2479 = vadd.f32 %v2320, %v2478
      %v2480 = vpop.f32.mrf.mxu0
      %v2481 = vpop.f32.mrf.mxu0
      %v2482 = vadd.f32 %v2323, %v2481
      %v2483 = vpop.f32.mrf.mxu0
      %2484 = vdwg.mxu0
      %v2485 = vadd.f32 %v1848, %v2367
      %v2486 = vadd.f32 %v1851, %v2370
      %v2487 = vadd.f32 %v1856, %v2375
      %v2488 = vadd.f32 %v1859, %v2378
      %v2489 = vadd.f32 %v1864, %v2383
      %v2490 = vadd.f32 %v1867, %v2386
      %v2491 = vadd.f32 %v1872, %v2391
      %v2492 = vadd.f32 %v1875, %v2394
      %v2493 = vadd.f32 %v1880, %v2399
      %v2494 = vadd.f32 %v1883, %v2402
      %v2495 = vadd.f32 %v1888, %v2407
      %v2496 = vadd.f32 %v1891, %v2410
      %v2497 = vadd.f32 %v1896, %v2415
      %v2498 = vadd.f32 %v1899, %v2418
      %v2499 = vadd.f32 %v1904, %v2423
      %v2500 = vadd.f32 %v1907, %v2426
      %v2501 = vadd.f32 %v1912, %v2431
      %v2502 = vadd.f32 %v1915, %v2434
      %v2503 = vadd.f32 %v1920, %v2439
      %v2504 = vadd.f32 %v1923, %v2442
      %v2505 = vadd.f32 %v1928, %v2447
      %v2506 = vadd.f32 %v1931, %v2450
      %v2507 = vadd.f32 %v1936, %v2455
      %v2508 = vadd.f32 %v1939, %v2458
      %v2509 = vadd.f32 %v1944, %v2463
      %v2510 = vadd.f32 %v1947, %v2466
      %v2511 = vadd.f32 %v1952, %v2471
      %v2512 = vadd.f32 %v1955, %v2474
      %v2513 = vadd.f32 %v1960, %v2479
      %v2514 = vadd.f32 %v1963, %v2482
      %v2515 = vadd.f32 %v1968, 0.0
      %v2516 = vadd.f32 %v1971, 0.0
      %v2517 = vadd.f32 %v226, %v227
      %v2518 = vadd.f32 %v2517, %v228
      %v2519 = vadd.f32 %v2518, %v229
      %v2520 = vadd.f32 %v2519, %v230
      %v2521 = vadd.f32 %v2520, %v231
      %v2522 = vadd.f32 %v2521, %v232
      %v2523 = vadd.f32 %v2522, %v233
      %v2524 = vadd.f32 %v2523, %v234
      %v2525 = vadd.f32 %v2524, %v235
      %v2526 = vadd.f32 %v2525, %v236
      %v2527 = vadd.f32 %v2526, %v237
      %v2528 = vadd.f32 %v2527, %v238
      %v2529 = vadd.f32 %v2528, %v239
      %v2530 = vadd.f32 %v2529, %v240
      %v2531 = vadd.f32 %v2530, %v241
      %v2532 = vadd.f32 %v2531, %v242
      %v2533 = vadd.f32 %v2532, %v243
      %v2534 = vadd.f32 %v2533, %v244
      %v2535 = vadd.f32 %v2534, %v245
      %v2536 = vadd.f32 %v2535, %v246
      %v2537 = vadd.f32 %v2536, %v247
      %v2538 = vadd.f32 %v2537, %v248
      %v2539 = vadd.f32 %v2538, %v249
      %v2540 = vadd.f32 %v2539, %v250
      %v2541 = vadd.f32 %v2540, %v251
      %v2542 = vadd.f32 %v2541, %v252
      %v2543 = vadd.f32 %v2542, %v253
      %v2544 = vadd.f32 %v2543, %v254
      %v2545 = vadd.f32 %v2544, %v255
      %v2546 = vadd.f32 %v2545, %v256
      %v2547 = vadd.f32 %v2546, %v257
      %v2548 = vrot.slane %v2547, 4
      %v2549 = vadd.f32 %v2547, %v2548
      %v2550 = vrot.slane %v2549, 2
      %v2551 = vadd.f32 %v2549, %v2550
      %v2552 = vrot.slane %v2551, 1
      %v2553 = vadd.f32 %v2551, %v2552
      %v2554 = vmul.f32 %v2553, 0.00390625
      %v2555 = vpack.c.bf16 %v2554, %v2554
      %v2556 = vld [vmem:[%s3] sm:$0xf]
      %v2557 = vld [vmem:[%s3 + $0x4] sm:$0xf]
      %v2558 = vld [vmem:[%s3 + $0x8] sm:$0xf]
      %v2559 = vld [vmem:[%s3 + $0xc] sm:$0xf]
      %v2560 = vld [vmem:[%s3 + $0x10] sm:$0xf]
      %v2561 = vld [vmem:[%s3 + $0x14] sm:$0xf]
      %v2562 = vld [vmem:[%s3 + $0x18] sm:$0xf]
      %v2563 = vld [vmem:[%s3 + $0x1c] sm:$0xf]
      %v2564 = vld [vmem:[%s3 + $0x20] sm:$0xf]
      %v2565 = vld [vmem:[%s3 + $0x24] sm:$0xf]
      %v2566 = vld [vmem:[%s3 + $0x28] sm:$0xf]
      %v2567 = vld [vmem:[%s3 + $0x2c] sm:$0xf]
      %v2568 = vld [vmem:[%s3 + $0x30] sm:$0xf]
      %v2569 = vld [vmem:[%s3 + $0x34] sm:$0xf]
      %v2570 = vld [vmem:[%s3 + $0x38] sm:$0xf]
      %v2571 = vld [vmem:[%s3 + $0x3c] sm:$0xf]
      %v2572 = vld [vmem:[%s4] sm:$0x1]
      %v2589 = vunpack.c.l.b16 %v2556
      %v2590 = vunpack.c.l.b16 %v2557
      %v2591 = vunpack.c.l.b16 %v2558
      %v2592 = vunpack.c.l.b16 %v2559
      %v2593 = vunpack.c.l.b16 %v2560
      %v2594 = vunpack.c.l.b16 %v2561
      %v2595 = vunpack.c.l.b16 %v2562
      %v2596 = vunpack.c.l.b16 %v2563
      %v2597 = vunpack.c.l.b16 %v2564
      %v2598 = vunpack.c.l.b16 %v2565
      %v2599 = vunpack.c.l.b16 %v2566
      %v2600 = vunpack.c.l.b16 %v2567
      %v2601 = vunpack.c.l.b16 %v2568
      %v2602 = vunpack.c.l.b16 %v2569
      %v2603 = vunpack.c.l.b16 %v2570
      %v2604 = vunpack.c.l.b16 %v2571
      %v2605 = vpack.c.b16 %v2590, %v2589
      %v2606 = vpack.c.b16 %v2592, %v2591
      %v2607 = vpack.c.b16 %v2594, %v2593
      %v2608 = vpack.c.b16 %v2596, %v2595
      %v2609 = vpack.c.b16 %v2598, %v2597
      %v2610 = vpack.c.b16 %v2600, %v2599
      %v2611 = vpack.c.b16 %v2602, %v2601
      %v2612 = vpack.c.b16 %v2604, %v2603
      %2621 = vmatprep.subr.bf16.mxu0 0
      %2622 = vmatpush1.bf16.msra.mxu0 %v2612
      %2623 = vmatprep.subr.bf16.mxu0 0
      %2624 = vmatpush1.bf16.msra.mxu0 %v2611
      %2625 = vmatprep.subr.bf16.mxu0 0
      %2626 = vmatpush1.bf16.msra.mxu0 %v2610
      %2627 = vmatprep.subr.bf16.mxu0 0
      %2628 = vmatpush1.bf16.msra.mxu0 %v2609
      %2629 = vmatprep.subr.bf16.mxu0 0
      %2630 = vmatpush1.bf16.msra.mxu0 %v2608
      %2631 = vmatprep.subr.bf16.mxu0 0
      %2632 = vmatpush1.bf16.msra.mxu0 %v2607
      %2633 = vmatprep.subr.bf16.mxu0 0
      %2634 = vmatpush1.bf16.msra.mxu0 %v2606
      %2635 = vmatprep.subr.bf16.mxu0 0
      %2636 = vmatpush1.bf16.msra.mxu0 %v2605
      %2637 = vmatprep.subr.bf16.mxu0 0
      %2638 = vmatpush2.bf16.msra.mxu0 0
      %2639 = vmatprep.subr.bf16.mxu0 0
      %2640 = vmatpush2.bf16.msra.mxu0 0
      %2641 = vmatprep.subr.bf16.mxu0 0
      %2642 = vmatpush2.bf16.msra.mxu0 0
      %2643 = vmatprep.subr.bf16.mxu0 0
      %2644 = vmatpush2.bf16.msra.mxu0 0
      %2645 = vmatprep.subr.bf16.mxu0 0
      %2646 = vmatpush2.bf16.msra.mxu0 0
      %2647 = vmatprep.subr.bf16.mxu0 0
      %2648 = vmatpush2.bf16.msra.mxu0 0
      %2649 = vmatprep.subr.bf16.mxu0 0
      %2650 = vmatpush2.bf16.msra.mxu0 0
      %2651 = vmatprep.subr.bf16.mxu0 0
      %2652 = vmatpush2.bf16.msra.mxu0 0
      %2653 = vmatprep.mubr.bf16.mxu0 0
      %2654 = vmatmul.mubr.bf16.gmra.mxu0 %v2555
      %v2655 = vpop.f32.mrf.mxu0
      %v2656 = vadd.f32 %v2572, %v2655
      %v2657 = vpop.f32.mrf.mxu0
      %v2658 = vpop.f32.mrf.mxu0
      %v2659 = vpop.f32.mrf.mxu0
      %2660 = vdwg.mxu0
      %v2661 = vxor.u32 %v2656, 2147483648
      %v2662 = vmul.f32 %v2661, 1.442695
      %v2663 = vpow.pop %v2662
      %v2664 = vadd.f32 %v2663, 1.0
      %v2665 = vrcp.pop %v2664
      %v2666 = vmul.f32 1.0, %v2665
      %v2667 = vld [vmem:[%s2] sm:$0x1]
      %v2669 = vlaneseq
      %v2670 = vshrl.u32 %v2669, 7
      %v2671 = vsub.s32 0, %v2670
      %v2672 = vrot.slane %v2667, %v2671
      %v2674 = vadd.f32 %v2485, %v2672
      %v2675 = vadd.f32 %v2486, %v2672
      %v2676 = vadd.f32 %v2487, %v2672
      %v2677 = vadd.f32 %v2488, %v2672
      %v2678 = vadd.f32 %v2489, %v2672
      %v2679 = vadd.f32 %v2490, %v2672
      %v2680 = vadd.f32 %v2491, %v2672
      %v2681 = vadd.f32 %v2492, %v2672
      %v2682 = vadd.f32 %v2493, %v2672
      %v2683 = vadd.f32 %v2494, %v2672
      %v2684 = vadd.f32 %v2495, %v2672
      %v2685 = vadd.f32 %v2496, %v2672
      %v2686 = vadd.f32 %v2497, %v2672
      %v2687 = vadd.f32 %v2498, %v2672
      %v2688 = vadd.f32 %v2499, %v2672
      %v2689 = vadd.f32 %v2500, %v2672
      %v2690 = vadd.f32 %v2501, %v2672
      %v2691 = vadd.f32 %v2502, %v2672
      %v2692 = vadd.f32 %v2503, %v2672
      %v2693 = vadd.f32 %v2504, %v2672
      %v2694 = vadd.f32 %v2505, %v2672
      %v2695 = vadd.f32 %v2506, %v2672
      %v2696 = vadd.f32 %v2507, %v2672
      %v2697 = vadd.f32 %v2508, %v2672
      %v2698 = vadd.f32 %v2509, %v2672
      %v2699 = vadd.f32 %v2510, %v2672
      %v2700 = vadd.f32 %v2511, %v2672
      %v2701 = vadd.f32 %v2512, %v2672
      %v2702 = vadd.f32 %v2513, %v2672
      %v2703 = vadd.f32 %v2514, %v2672
      %v2704 = vadd.f32 %v2515, %v2672
      %v2705 = vadd.f32 %v2516, %v2672
      %v2706 = vlaneseq
      %v2707 = vshrl.u32 %v2706, 7
      %v2708 = vsub.s32 0, %v2707
      %v2709 = vrot.slane %v2666, %v2708
      %v2710 = vmul.f32 %v226, %v2709
      %v2711 = vmul.f32 %v227, %v2709
      %v2712 = vmul.f32 %v228, %v2709
      %v2713 = vmul.f32 %v229, %v2709
      %v2714 = vmul.f32 %v230, %v2709
      %v2715 = vmul.f32 %v231, %v2709
      %v2716 = vmul.f32 %v232, %v2709
      %v2717 = vmul.f32 %v233, %v2709
      %v2718 = vmul.f32 %v234, %v2709
      %v2719 = vmul.f32 %v235, %v2709
      %v2720 = vmul.f32 %v236, %v2709
      %v2721 = vmul.f32 %v237, %v2709
      %v2722 = vmul.f32 %v238, %v2709
      %v2723 = vmul.f32 %v239, %v2709
      %v2724 = vmul.f32 %v240, %v2709
      %v2725 = vmul.f32 %v241, %v2709
      %v2726 = vmul.f32 %v242, %v2709
      %v2727 = vmul.f32 %v243, %v2709
      %v2728 = vmul.f32 %v244, %v2709
      %v2729 = vmul.f32 %v245, %v2709
      %v2730 = vmul.f32 %v246, %v2709
      %v2731 = vmul.f32 %v247, %v2709
      %v2732 = vmul.f32 %v248, %v2709
      %v2733 = vmul.f32 %v249, %v2709
      %v2734 = vmul.f32 %v250, %v2709
      %v2735 = vmul.f32 %v251, %v2709
      %v2736 = vmul.f32 %v252, %v2709
      %v2737 = vmul.f32 %v253, %v2709
      %v2738 = vmul.f32 %v254, %v2709
      %v2739 = vmul.f32 %v255, %v2709
      %v2740 = vmul.f32 %v256, %v2709
      %v2741 = vmul.f32 %v257, %v2709
      %v2742 = vadd.f32 %v2674, %v2710
      %v2743 = vadd.f32 %v2675, %v2711
      %v2744 = vadd.f32 %v2676, %v2712
      %v2745 = vadd.f32 %v2677, %v2713
      %v2746 = vadd.f32 %v2678, %v2714
      %v2747 = vadd.f32 %v2679, %v2715
      %v2748 = vadd.f32 %v2680, %v2716
      %v2749 = vadd.f32 %v2681, %v2717
      %v2750 = vadd.f32 %v2682, %v2718
      %v2751 = vadd.f32 %v2683, %v2719
      %v2752 = vadd.f32 %v2684, %v2720
      %v2753 = vadd.f32 %v2685, %v2721
      %v2754 = vadd.f32 %v2686, %v2722
      %v2755 = vadd.f32 %v2687, %v2723
      %v2756 = vadd.f32 %v2688, %v2724
      %v2757 = vadd.f32 %v2689, %v2725
      %v2758 = vadd.f32 %v2690, %v2726
      %v2759 = vadd.f32 %v2691, %v2727
      %v2760 = vadd.f32 %v2692, %v2728
      %v2761 = vadd.f32 %v2693, %v2729
      %v2762 = vadd.f32 %v2694, %v2730
      %v2763 = vadd.f32 %v2695, %v2731
      %v2764 = vadd.f32 %v2696, %v2732
      %v2765 = vadd.f32 %v2697, %v2733
      %v2766 = vadd.f32 %v2698, %v2734
      %v2767 = vadd.f32 %v2699, %v2735
      %v2768 = vadd.f32 %v2700, %v2736
      %v2769 = vadd.f32 %v2701, %v2737
      %v2770 = vadd.f32 %v2702, %v2738
      %v2771 = vadd.f32 %v2703, %v2739
      %v2772 = vadd.f32 %v2704, %v2740
      %v2773 = vadd.f32 %v2705, %v2741
      %v2774 = vxor.u32 %v2742, 2147483648
      %v2775 = vxor.u32 %v2743, 2147483648
      %v2776 = vxor.u32 %v2744, 2147483648
      %v2777 = vxor.u32 %v2745, 2147483648
      %v2778 = vxor.u32 %v2746, 2147483648
      %v2779 = vxor.u32 %v2747, 2147483648
      %v2780 = vxor.u32 %v2748, 2147483648
      %v2781 = vxor.u32 %v2749, 2147483648
      %v2782 = vxor.u32 %v2750, 2147483648
      %v2783 = vxor.u32 %v2751, 2147483648
      %v2784 = vxor.u32 %v2752, 2147483648
      %v2785 = vxor.u32 %v2753, 2147483648
      %v2786 = vxor.u32 %v2754, 2147483648
      %v2787 = vxor.u32 %v2755, 2147483648
      %v2788 = vxor.u32 %v2756, 2147483648
      %v2789 = vxor.u32 %v2757, 2147483648
      %v2790 = vxor.u32 %v2758, 2147483648
      %v2791 = vxor.u32 %v2759, 2147483648
      %v2792 = vxor.u32 %v2760, 2147483648
      %v2793 = vxor.u32 %v2761, 2147483648
      %v2794 = vxor.u32 %v2762, 2147483648
      %v2795 = vxor.u32 %v2763, 2147483648
      %v2796 = vxor.u32 %v2764, 2147483648
      %v2797 = vxor.u32 %v2765, 2147483648
      %v2798 = vxor.u32 %v2766, 2147483648
      %v2799 = vxor.u32 %v2767, 2147483648
      %v2800 = vxor.u32 %v2768, 2147483648
      %v2801 = vxor.u32 %v2769, 2147483648
      %v2802 = vxor.u32 %v2770, 2147483648
      %v2803 = vxor.u32 %v2771, 2147483648
      %v2804 = vxor.u32 %v2772, 2147483648
      %v2805 = vxor.u32 %v2773, 2147483648
      %v2806 = vmul.f32 %v2774, 1.442695
      %v2807 = vpow.pop %v2806
      %v2808 = vmul.f32 %v2775, 1.442695
      %v2809 = vpow.pop %v2808
      %v2810 = vmul.f32 %v2776, 1.442695
      %v2811 = vpow.pop %v2810
      %v2812 = vmul.f32 %v2777, 1.442695
      %v2813 = vpow.pop %v2812
      %v2814 = vmul.f32 %v2778, 1.442695
      %v2815 = vpow.pop %v2814
      %v2816 = vmul.f32 %v2779, 1.442695
      %v2817 = vpow.pop %v2816
      %v2818 = vmul.f32 %v2780, 1.442695
      %v2819 = vpow.pop %v2818
      %v2820 = vmul.f32 %v2781, 1.442695
      %v2821 = vpow.pop %v2820
      %v2822 = vmul.f32 %v2782, 1.442695
      %v2823 = vpow.pop %v2822
      %v2824 = vmul.f32 %v2783, 1.442695
      %v2825 = vpow.pop %v2824
      %v2826 = vmul.f32 %v2784, 1.442695
      %v2827 = vpow.pop %v2826
      %v2828 = vmul.f32 %v2785, 1.442695
      %v2829 = vpow.pop %v2828
      %v2830 = vmul.f32 %v2786, 1.442695
      %v2831 = vpow.pop %v2830
      %v2832 = vmul.f32 %v2787, 1.442695
      %v2833 = vpow.pop %v2832
      %v2834 = vmul.f32 %v2788, 1.442695
      %v2835 = vpow.pop %v2834
      %v2836 = vmul.f32 %v2789, 1.442695
      %v2837 = vpow.pop %v2836
      %v2838 = vmul.f32 %v2790, 1.442695
      %v2839 = vpow.pop %v2838
      %v2840 = vmul.f32 %v2791, 1.442695
      %v2841 = vpow.pop %v2840
      %v2842 = vmul.f32 %v2792, 1.442695
      %v2843 = vpow.pop %v2842
      %v2844 = vmul.f32 %v2793, 1.442695
      %v2845 = vpow.pop %v2844
      %v2846 = vmul.f32 %v2794, 1.442695
      %v2847 = vpow.pop %v2846
      %v2848 = vmul.f32 %v2795, 1.442695
      %v2849 = vpow.pop %v2848
      %v2850 = vmul.f32 %v2796, 1.442695
      %v2851 = vpow.pop %v2850
      %v2852 = vmul.f32 %v2797, 1.442695
      %v2853 = vpow.pop %v2852
      %v2854 = vmul.f32 %v2798, 1.442695
      %v2855 = vpow.pop %v2854
      %v2856 = vmul.f32 %v2799, 1.442695
      %v2857 = vpow.pop %v2856
      %v2858 = vmul.f32 %v2800, 1.442695
      %v2859 = vpow.pop %v2858
      %v2860 = vmul.f32 %v2801, 1.442695
      %v2861 = vpow.pop %v2860
      %v2862 = vmul.f32 %v2802, 1.442695
      %v2863 = vpow.pop %v2862
      %v2864 = vmul.f32 %v2803, 1.442695
      %v2865 = vpow.pop %v2864
      %v2866 = vmul.f32 %v2804, 1.442695
      %v2867 = vpow.pop %v2866
      %v2868 = vmul.f32 %v2805, 1.442695
      %v2869 = vpow.pop %v2868
      %v2870 = vadd.f32 %v2807, 1.0
      %v2871 = vadd.f32 %v2809, 1.0
      %v2872 = vadd.f32 %v2811, 1.0
      %v2873 = vadd.f32 %v2813, 1.0
      %v2874 = vadd.f32 %v2815, 1.0
      %v2875 = vadd.f32 %v2817, 1.0
      %v2876 = vadd.f32 %v2819, 1.0
      %v2877 = vadd.f32 %v2821, 1.0
      %v2878 = vadd.f32 %v2823, 1.0
      %v2879 = vadd.f32 %v2825, 1.0
      %v2880 = vadd.f32 %v2827, 1.0
      %v2881 = vadd.f32 %v2829, 1.0
      %v2882 = vadd.f32 %v2831, 1.0
      %v2883 = vadd.f32 %v2833, 1.0
      %v2884 = vadd.f32 %v2835, 1.0
      %v2885 = vadd.f32 %v2837, 1.0
      %v2886 = vadd.f32 %v2839, 1.0
      %v2887 = vadd.f32 %v2841, 1.0
      %v2888 = vadd.f32 %v2843, 1.0
      %v2889 = vadd.f32 %v2845, 1.0
      %v2890 = vadd.f32 %v2847, 1.0
      %v2891 = vadd.f32 %v2849, 1.0
      %v2892 = vadd.f32 %v2851, 1.0
      %v2893 = vadd.f32 %v2853, 1.0
      %v2894 = vadd.f32 %v2855, 1.0
      %v2895 = vadd.f32 %v2857, 1.0
      %v2896 = vadd.f32 %v2859, 1.0
      %v2897 = vadd.f32 %v2861, 1.0
      %v2898 = vadd.f32 %v2863, 1.0
      %v2899 = vadd.f32 %v2865, 1.0
      %v2900 = vadd.f32 %v2867, 1.0
      %v2901 = vadd.f32 %v2869, 1.0
      %v2902 = vrcp.pop %v2870
      %v2903 = vmul.f32 1.0, %v2902
      %v2904 = vrcp.pop %v2871
      %v2905 = vmul.f32 1.0, %v2904
      %v2906 = vrcp.pop %v2872
      %v2907 = vmul.f32 1.0, %v2906
      %v2908 = vrcp.pop %v2873
      %v2909 = vmul.f32 1.0, %v2908
      %v2910 = vrcp.pop %v2874
      %v2911 = vmul.f32 1.0, %v2910
      %v2912 = vrcp.pop %v2875
      %v2913 = vmul.f32 1.0, %v2912
      %v2914 = vrcp.pop %v2876
      %v2915 = vmul.f32 1.0, %v2914
      %v2916 = vrcp.pop %v2877
      %v2917 = vmul.f32 1.0, %v2916
      %v2918 = vrcp.pop %v2878
      %v2919 = vmul.f32 1.0, %v2918
      %v2920 = vrcp.pop %v2879
      %v2921 = vmul.f32 1.0, %v2920
      %v2922 = vrcp.pop %v2880
      %v2923 = vmul.f32 1.0, %v2922
      %v2924 = vrcp.pop %v2881
      %v2925 = vmul.f32 1.0, %v2924
      %v2926 = vrcp.pop %v2882
      %v2927 = vmul.f32 1.0, %v2926
      %v2928 = vrcp.pop %v2883
      %v2929 = vmul.f32 1.0, %v2928
      %v2930 = vrcp.pop %v2884
      %v2931 = vmul.f32 1.0, %v2930
      %v2932 = vrcp.pop %v2885
      %v2933 = vmul.f32 1.0, %v2932
      %v2934 = vrcp.pop %v2886
      %v2935 = vmul.f32 1.0, %v2934
      %v2936 = vrcp.pop %v2887
      %v2937 = vmul.f32 1.0, %v2936
      %v2938 = vrcp.pop %v2888
      %v2939 = vmul.f32 1.0, %v2938
      %v2940 = vrcp.pop %v2889
      %v2941 = vmul.f32 1.0, %v2940
      %v2942 = vrcp.pop %v2890
      %v2943 = vmul.f32 1.0, %v2942
      %v2944 = vrcp.pop %v2891
      %v2945 = vmul.f32 1.0, %v2944
      %v2946 = vrcp.pop %v2892
      %v2947 = vmul.f32 1.0, %v2946
      %v2948 = vrcp.pop %v2893
      %v2949 = vmul.f32 1.0, %v2948
      %v2950 = vrcp.pop %v2894
      %v2951 = vmul.f32 1.0, %v2950
      %v2952 = vrcp.pop %v2895
      %v2953 = vmul.f32 1.0, %v2952
      %v2954 = vrcp.pop %v2896
      %v2955 = vmul.f32 1.0, %v2954
      %v2956 = vrcp.pop %v2897
      %v2957 = vmul.f32 1.0, %v2956
      %v2958 = vrcp.pop %v2898
      %v2959 = vmul.f32 1.0, %v2958
      %v2960 = vrcp.pop %v2899
      %v2961 = vmul.f32 1.0, %v2960
      %v2962 = vrcp.pop %v2900
      %v2963 = vmul.f32 1.0, %v2962
      %v2964 = vrcp.pop %v2901
      %v2965 = vmul.f32 1.0, %v2964
      %v2966 = vmul.f32 %v2742, %v2903
      %v2967 = vmul.f32 %v2743, %v2905
      %v2968 = vmul.f32 %v2744, %v2907
      %v2969 = vmul.f32 %v2745, %v2909
      %v2970 = vmul.f32 %v2746, %v2911
      %v2971 = vmul.f32 %v2747, %v2913
      %v2972 = vmul.f32 %v2748, %v2915
      %v2973 = vmul.f32 %v2749, %v2917
      %v2974 = vmul.f32 %v2750, %v2919
      %v2975 = vmul.f32 %v2751, %v2921
      %v2976 = vmul.f32 %v2752, %v2923
      %v2977 = vmul.f32 %v2753, %v2925
      %v2978 = vmul.f32 %v2754, %v2927
      %v2979 = vmul.f32 %v2755, %v2929
      %v2980 = vmul.f32 %v2756, %v2931
      %v2981 = vmul.f32 %v2757, %v2933
      %v2982 = vmul.f32 %v2758, %v2935
      %v2983 = vmul.f32 %v2759, %v2937
      %v2984 = vmul.f32 %v2760, %v2939
      %v2985 = vmul.f32 %v2761, %v2941
      %v2986 = vmul.f32 %v2762, %v2943
      %v2987 = vmul.f32 %v2763, %v2945
      %v2988 = vmul.f32 %v2764, %v2947
      %v2989 = vmul.f32 %v2765, %v2949
      %v2990 = vmul.f32 %v2766, %v2951
      %v2991 = vmul.f32 %v2767, %v2953
      %v2992 = vmul.f32 %v2768, %v2955
      %v2993 = vmul.f32 %v2769, %v2957
      %v2994 = vmul.f32 %v2770, %v2959
      %v2995 = vmul.f32 %v2771, %v2961
      %v2996 = vmul.f32 %v2772, %v2963
      %v2997 = vmul.f32 %v2773, %v2965
      %2998 = vst [vmem:[%s224] sm:$0xff] %v2966
      %2999 = vst [vmem:[%s224 + $0x8] sm:$0xff] %v2967
      %3000 = vst [vmem:[%s224 + $0x10] sm:$0xff] %v2968
      %3001 = vst [vmem:[%s224 + $0x18] sm:$0xff] %v2969
      %3002 = vst [vmem:[%s224 + $0x20] sm:$0xff] %v2970
      %3003 = vst [vmem:[%s224 + $0x28] sm:$0xff] %v2971
      %3004 = vst [vmem:[%s224 + $0x30] sm:$0xff] %v2972
      %3005 = vst [vmem:[%s224 + $0x38] sm:$0xff] %v2973
      %3006 = vst [vmem:[%s224 + $0x40] sm:$0xff] %v2974
      %3007 = vst [vmem:[%s224 + $0x48] sm:$0xff] %v2975
      %3008 = vst [vmem:[%s224 + $0x50] sm:$0xff] %v2976
      %3009 = vst [vmem:[%s224 + $0x58] sm:$0xff] %v2977
      %3010 = vst [vmem:[%s224 + $0x60] sm:$0xff] %v2978
      %3011 = vst [vmem:[%s224 + $0x68] sm:$0xff] %v2979
      %3012 = vst [vmem:[%s224 + $0x70] sm:$0xff] %v2980
      %3013 = vst [vmem:[%s224 + $0x78] sm:$0xff] %v2981
      %3014 = vst [vmem:[%s224 + $0x80] sm:$0xff] %v2982
      %3015 = vst [vmem:[%s224 + $0x88] sm:$0xff] %v2983
      %3016 = vst [vmem:[%s224 + $0x90] sm:$0xff] %v2984
      %3017 = vst [vmem:[%s224 + $0x98] sm:$0xff] %v2985
      %3018 = vst [vmem:[%s224 + $0xa0] sm:$0xff] %v2986
      %3019 = vst [vmem:[%s224 + $0xa8] sm:$0xff] %v2987
      %3020 = vst [vmem:[%s224 + $0xb0] sm:$0xff] %v2988
      %3021 = vst [vmem:[%s224 + $0xb8] sm:$0xff] %v2989
      %3022 = vst [vmem:[%s224 + $0xc0] sm:$0xff] %v2990
      %3023 = vst [vmem:[%s224 + $0xc8] sm:$0xff] %v2991
      %3024 = vst [vmem:[%s224 + $0xd0] sm:$0xff] %v2992
      %3025 = vst [vmem:[%s224 + $0xd8] sm:$0xff] %v2993
      %3026 = vst [vmem:[%s224 + $0xe0] sm:$0xff] %v2994
      %3027 = vst [vmem:[%s224 + $0xe8] sm:$0xff] %v2995
      %3028 = vst [vmem:[%s224 + $0xf0] sm:$0xff] %v2996
      %3029 = vst [vmem:[%s224 + $0xf8] sm:$0xff] %v2997
      %p3030 = scmp.lt.s32.totalorder %s16, 1
      %s3031 = scalar_select %p3030, %s16, 1
      %s3032 = smul.addr %s3031, 32
      %s3033 = smul.addr %s3032, 8
      %s3034 = scalar_lea.vmem %s5, %s3033
      // Predicated region
      $region41: #{parnet_attention.1} parent=39 // pred_check
        %p3035 = pneg %p144
      $region42: #{parnet_attention.1} parent=39 // pred_check_branch
        %3037 = sbr.rel (%p3035) target = $region44
      $region43: #{parnet_attention.1} parent=39 // pred_region
        _
      $region44: #{parnet_attention.1} parent=39 // pred_fallthru
        _
    $region40: #{parnet_attention.1} parent=5 // pred_fallthru
      _
    %p3038 = scmp.le.s32.totalorder 2, %s11
    // Predicated region
    $region45: #{parnet_attention.1} parent=5 // pred_check
      %p3039 = pneg %p3038
    $region46: #{parnet_attention.1} parent=5 // pred_check_branch
      %3041 = sbr.rel (%p3039) target = $region48
    $region47: #{parnet_attention.1} parent=5 // pred_region
      %s3042 = ssub.s32 %s11, 2
      // Predicated region
      $region49: #{parnet_attention.1} parent=47 // pred_check
        %p3043 = pneg %p150
      $region50: #{parnet_attention.1} parent=47 // pred_check_branch
        %3045 = sbr.rel (%p3043) target = $region52
      $region51: #{parnet_attention.1} parent=47 // pred_region
        %p3046 = scmp.lt.s32.totalorder %s17, 1
        %s3047 = scalar_select %p3046, %s17, 1
        %s3048 = smul.addr %s3047, 32
        %s3049 = smul.addr %s3048, 8
        %s3050 = scalar_lea.vmem %s5, %s3049
      $region52: #{parnet_attention.1} parent=47 // pred_fallthru
        _
    $region48: #{parnet_attention.1} parent=5 // pred_fallthru
      _
  $region6: #{parnet_attention.1} parent=0 // loop_footer
    %s15 = sadd.s32 1, %s11
  $region7: #{parnet_attention.1} parent=0 // loop_footer_branch
    %10 = sbr.rel target = $region3
  $region8: #{parnet_attention.1} parent=0 // loop_exit
    _

</llo_original>
